<compile_context>
chip_gen: v7x
topology: tpu7x:2x2x1
jax: 0.10.0
libtpu: 0.0.40
codegen_flags: <defaults>
</compile_context>

<pallas_src>
import functools

import numpy as np
import jax
import jax.numpy as jnp
from jax import lax
from jax.experimental import pallas as pl
from jax.experimental.pallas import tpu as pltpu

# ----- module hyper-params (param dict of the PyTorch module) ---------------
ACTIVATION = "relu"   # param['activation'] in {'relu', 'tanh'}
POOL = "max"          # param['pool'] in {'max', 'avg'}
HIDDEN = 32           # param['hidden']
LANES = 128           # every channel dimension is zero-padded to one lane tile
NB_MAX = 64           # per-block batch cap (multiple of 8); raise for huge batches
VMEM_LIMIT_BYTES = 48 * 1024 * 1024   # explicit scoped-VMEM budget (safe on v5e..v7x)


def _act(x):
    if ACTIVATION == "relu":
        return jnp.maximum(x, 0.0)
    return jnp.tanh(x)


def _cdiv(a, b):
    return -(-a // b)


def _round_up(x, m):
    return ((x + m - 1) // m) * m


# ----------------------------- fused Pallas kernel ---------------------------
def _compnet4_kernel(p_ref, w1_ref, b1_ref, w2_ref, b2_ref, w3_ref, b3_ref,
                     wf1_ref, bf1_ref, wf2_ref, bf2_ref, out_ref, *, nb, n_pool1):
    f32 = jnp.float32
    cdt = w2_ref.dtype                       # compute dtype of the GEMM operands
    patches = p_ref[...]                     # (16*nb, 64): 8x8 window per conv2 pos

    # ---- conv1 + pool1: each pool tap is one GEMM over the SHARED 64-lane LHS.
    # The RHS columns are laid out as (conv2-tap[9] x conv1-channel[4]) = 36
    # lanes, so the pooled/activated result is already conv2's im2col.
    # max-pool -> max over the tap GEMMs; avg-pool -> RHS pre-averaged (n_pool1=1).
    pool1 = jnp.dot(patches, w1_ref[0], preferred_element_type=f32)
    for p in range(1, n_pool1):
        pool1 = jnp.maximum(
            pool1, jnp.dot(patches, w1_ref[p], preferred_element_type=f32))
    a1 = _act(pool1 + b1_ref[...])           # (16*nb, 128) f32, lanes 0..35 live

    # ---- conv2: ONE GEMM, K packs (9 taps x 4 ch) = 36 lanes (was 9 GEMMs). ----
    acc2 = jnp.dot(a1.astype(cdt), w2_ref[...], preferred_element_type=f32)

    # ---- pool2 over the 4 aligned row blocks (rows are pool2-tap major) --------
    g = 4 * nb
    u0, u1 = acc2[0:g], acc2[g:2 * g]
    u2, u3 = acc2[2 * g:3 * g], acc2[3 * g:4 * g]
    if POOL == "max":
        pool2 = jnp.maximum(jnp.maximum(u0, u1), jnp.maximum(u2, u3))
    else:
        pool2 = (u0 + u1 + u2 + u3) * 0.25
    a2 = _act(pool2 + b2_ref[...])           # (4*nb, 128) f32, lanes 0..15 live

    # ---- conv3: the 4 taps are 8-aligned static nb-row slices (no sel3). -------
    a2c = a2.astype(cdt)
    acc3 = jnp.dot(a2c[0:nb], w3_ref[0], preferred_element_type=f32)
    for p in range(1, 4):
        acc3 = acc3 + jnp.dot(a2c[p * nb:(p + 1) * nb], w3_ref[p],
                              preferred_element_type=f32)
    a3 = _act(acc3 + b3_ref[...])            # (nb, 128) f32, lanes 0..119 live

    # ---- fc1 + act, fc2 ---------------------------------------------------------
    h = _act(jnp.dot(a3.astype(cdt), wf1_ref[...], preferred_element_type=f32)
             + bf1_ref[...])
    out_ref[...] = (jnp.dot(h.astype(cdt), wf2_ref[...], preferred_element_type=f32)
                    + bf2_ref[...])          # (nb, 128) f32, lanes 0..9 are logits


# ----------------------------- host-side glue --------------------------------
def _patch_index(nblk, nb):
    """int32 (nblk*16*nb, 64) gather indices into the flat padded image buffer.

    Row order per block: (pool2-tap[4], pooled2-pos[4], batch[nb]); each row's
    64 lanes are the 8x8 image window feeding that conv2 output position."""
    blk = np.arange(nblk).reshape(-1, 1, 1, 1, 1)
    pt2 = np.arange(4).reshape(1, -1, 1, 1, 1)
    pp2 = np.arange(4).reshape(1, 1, -1, 1, 1)
    b = np.arange(nb).reshape(1, 1, 1, -1, 1)
    k = np.arange(64).reshape(1, 1, 1, 1, -1)
    oh = 2 * (pp2 // 2) + pt2 // 2           # conv2 output row in [0,4)
    ow = 2 * (pp2 % 2) + pt2 % 2             # conv2 output col in [0,4)
    h = 2 * oh + k // 8                      # image row in [0,14)
    w = 2 * ow + k % 8                       # image col in [0,14)
    img = blk * nb + b                       # global (padded) image index
    flat = img * 196 + h * 14 + w
    return np.ascontiguousarray(flat.reshape(nblk * 16 * nb, 64)).astype(np.int32)


@functools.lru_cache(maxsize=None)
def _conv1_scatter_indices():
    """Static indices embedding the 3x3 conv1 filters into the 4 pool-tap RHS."""
    p1s, lanes, cols, srcs = [], [], [], []
    for ph in range(2):
        for pw in range(2):
            p1 = 2 * ph + pw
            for ki in range(3):
                for kj in range(3):
                    for c in range(4):
                        col = 4 * (3 * ki + kj) + c
                        for u in range(3):
                            for v in range(3):
                                p1s.append(p1)
                                lanes.append(8 * (2 * ki + ph + u)
                                             + (2 * kj + pw + v))
                                cols.append(col)
                                srcs.append(9 * c + 3 * u + v)
    return (np.asarray(p1s), np.asarray(lanes),
            np.asarray(cols), np.asarray(srcs))


def _prep_weights(p, hidden, cdt):
    """Zero-pad / repack all weights to lane-dense layouts (traceable)."""
    f32 = jnp.float32
    p1s, lanes, cols, srcs = _conv1_scatter_indices()
    w1flat = p["conv1_w"].reshape(-1).astype(f32)                  # (36,) = (c,u,v)
    w1 = jnp.zeros((4, 64, LANES), f32).at[p1s, lanes, cols].set(w1flat[srcs])
    if POOL == "avg":
        w1 = jnp.mean(w1, axis=0, keepdims=True)                   # fold avg-pool
    b1 = jnp.zeros((1, LANES), f32).at[0, :36].set(jnp.tile(p["conv1_b"], 9))

    w2t = p["conv2_w"].transpose(2, 3, 1, 0).reshape(36, 16)       # (tap*ci, co)
    w2 = jnp.zeros((LANES, LANES), f32).at[:36, :16].set(w2t)
    b2 = jnp.zeros((1, LANES), f32).at[0, :16].set(p["conv2_b"])

    w3t = p["conv3_w"].transpose(2, 3, 1, 0).reshape(4, 16, 120)   # (tap, ci, co)
    w3 = jnp.zeros((4, LANES, LANES), f32).at[:, :16, :120].set(w3t)
    b3 = jnp.zeros((1, LANES), f32).at[0, :120].set(p["conv3_b"])

    wf1 = jnp.zeros((LANES, LANES), f32).at[:120, :hidden].set(p["fc1_w"])
    bf1 = jnp.zeros((1, LANES), f32).at[0, :hidden].set(p["fc1_b"])
    wf2 = jnp.zeros((LANES, LANES), f32).at[:hidden, :10].set(p["fc2_w"])
    bf2 = jnp.zeros((1, LANES), f32).at[0, :10].set(p["fc2_b"])
    # GEMM operands in compute dtype (bf16 by default); biases stay f32.
    return (w1.astype(cdt), b1, w2.astype(cdt), b2, w3.astype(cdt), b3,
            wf1.astype(cdt), bf1, wf2.astype(cdt), bf2)


def _fused_branch(imgs, params, compute_dtype=jnp.bfloat16):
    """imgs: (T, 1, 14, 14) f32 -> logits (T, 10) in ONE pallas_call."""
    total = imgs.shape[0]
    hidden = params["fc1_w"].shape[1]

    # Capped per-block batch (multiple of 8 keeps all in-kernel slices aligned
    # and makes the output block exactly (nb, 128) -> no masked stores).
    nb = min(NB_MAX, _round_up(total, 8))
    nblk = _cdiv(total, nb)
    if nblk > 1 and nblk % 2 == 1:
        # Re-split over an even block count so both v7x TensorCores stay busy.
        nblk += 1
        nb = min(NB_MAX, _round_up(_cdiv(total, nblk), 8))
        nblk = _cdiv(total, nb)
        if nblk > 1 and nblk % 2 == 1:
            nblk += 1
    padded = nblk * nb

    imgs_flat = imgs.reshape(total, 14 * 14).astype(compute_dtype)
    imgs_flat = jnp.pad(imgs_flat, ((0, padded - total), (0, 0))).reshape(-1)
    idx = jnp.asarray(_patch_index(nblk, nb))
    patches = jnp.take(imgs_flat, idx)                 # (nblk*16*nb, 64) bf16/f32

    weights = _prep_weights(params, hidden, compute_dtype)
    n_pool1 = weights[0].shape[0]                      # 4 for max-pool, 1 for avg
    r = 16 * nb

    out = pl.pallas_call(
        functools.partial(_compnet4_kernel, nb=nb, n_pool1=n_pool1),
        out_shape=jax.ShapeDtypeStruct((padded, LANES), jnp.float32),
        grid=(nblk,),
        in_specs=[
            pl.BlockSpec((r, 64), lambda i: (i, 0)),                    # patches
            pl.BlockSpec((n_pool1, 64, LANES), lambda i: (0, 0, 0)),    # w1 (per tap)
            pl.BlockSpec((1, LANES), lambda i: (0, 0)),                 # b1
            pl.BlockSpec((LANES, LANES), lambda i: (0, 0)),             # w2 (packed K=36)
            pl.BlockSpec((1, LANES), lambda i: (0, 0)),                 # b2
            pl.BlockSpec((4, LANES, LANES), lambda i: (0, 0, 0)),       # w3 (per tap)
            pl.BlockSpec((1, LANES), lambda i: (0, 0)),                 # b3
            pl.BlockSpec((LANES, LANES), lambda i: (0, 0)),             # fc1
            pl.BlockSpec((1, LANES), lambda i: (0, 0)),                 # fc1 bias
            pl.BlockSpec((LANES, LANES), lambda i: (0, 0)),             # fc2
            pl.BlockSpec((1, LANES), lambda i: (0, 0)),                 # fc2 bias
        ],
        out_specs=pl.BlockSpec((nb, LANES), lambda i: (i, 0)),
        compiler_params=pltpu.CompilerParams(
            dimension_semantics=("parallel",),
            vmem_limit_bytes=VMEM_LIMIT_BYTES),
    )(patches, *weights)

    # keep only the real rows / the 10 real logit lanes (padded lanes are bias-pad 0).
    return out[:total, :10]


# ----------------------------- parameters ------------------------------------
def _uniform(key, shape, fan_in):
    bound = 1.0 / jnp.sqrt(jnp.float32(fan_in))
    return jax.random.uniform(key, shape, jnp.float32, -bound, bound)


def init_params(seed=42):
    ks = jax.random.split(jax.random.PRNGKey(seed), 12)
    p = {}
    p["conv1_w"] = _uniform(ks[0], (4, 1, 3, 3), 1 * 3 * 3)
    p["conv1_b"] = _uniform(ks[1], (4,), 1 * 3 * 3)
    p["conv2_w"] = _uniform(ks[2], (16, 4, 3, 3), 4 * 3 * 3)
    p["conv2_b"] = _uniform(ks[3], (16,), 4 * 3 * 3)
    p["conv3_w"] = _uniform(ks[4], (120, 16, 2, 2), 16 * 2 * 2)
    p["conv3_b"] = _uniform(ks[5], (120,), 16 * 2 * 2)
    p["fc1_w"] = _uniform(ks[6], (120, HIDDEN), 120)   # stored (in, out)
    p["fc1_b"] = _uniform(ks[7], (HIDDEN,), 120)
    p["fc2_w"] = _uniform(ks[8], (HIDDEN, 10), HIDDEN)
    p["fc2_b"] = _uniform(ks[9], (10,), HIDDEN)
    p["fcnaive_w"] = _uniform(ks[10], (2, 2), 2)
    p["fcnaive_b"] = _uniform(ks[11], (2,), 2)
    # fc3/fc4/fc5 and drop1..drop5 exist in __init__ but are unused in forward()
    return p


# ----------------------------- forward ---------------------------------------
def compnet4_forward(inp, params, compute_dtype=jnp.bfloat16):
    # inp: (N, 2, 14, 14) f32
    n = inp.shape[0]
    imgs = jnp.concatenate([inp[:, 0:1, :, :], inp[:, 1:2, :, :]], axis=0)  # (2N,1,14,14)
    logits = _fused_branch(imgs, params, compute_dtype)                      # (2N, 10)
    x, y = logits[:n], logits[n:]
    # torch: z = stack([x.max(1)[1].float(), y.max(1)[1].float()], dim=1); fcnaive(z)
    zx = jnp.argmax(x, axis=1).astype(jnp.float32)
    zy = jnp.argmax(y, axis=1).astype(jnp.float32)
    z = jnp.stack([zx, zy], axis=1)
    z = z @ params["fcnaive_w"] + params["fcnaive_b"]   # 16 FLOPs: plain jnp, no kernel
    return x, y, z


# ----------------------------- pure-JAX reference (sanity check) -------------
def _reference_forward(inp, p):
    hp = lax.Precision.HIGHEST

    def conv(x, w, b):
        y = lax.conv_general_dilated(
            x, w, window_strides=(1, 1), padding="VALID",
            dimension_numbers=("NCHW", "OIHW", "NCHW"), precision=hp)
        return y + b[None, :, None, None]

    def pool(x):
        n_, c_, h_, w_ = x.shape
        xr = x.reshape(n_, c_, h_ // 2, 2, w_ // 2, 2)
        return xr.max(axis=(3, 5)) if POOL == "max" else xr.mean(axis=(3, 5))

    def branch(img):
        h = _act(pool(conv(img, p["conv1_w"], p["conv1_b"])))
        h = _act(pool(conv(h, p["conv2_w"], p["conv2_b"])))
        h = _act(conv(h, p["conv3_w"], p["conv3_b"])).reshape(-1, 120)
        h = _act(jnp.dot(h, p["fc1_w"], precision=hp) + p["fc1_b"])
        return jnp.dot(h, p["fc2_w"], precision=hp) + p["fc2_b"]

    x = branch(inp[:, 0:1, :, :])
    y = branch(inp[:, 1:2, :, :])
    zx = jnp.argmax(x, axis=1).astype(jnp.float32)
    zy = jnp.argmax(y, axis=1).astype(jnp.float32)
    z = jnp.stack([zx, zy], axis=1) @ p["fcnaive_w"] + p["fcnaive_b"]
    return x, y, z


# ----------------------------- main -------------------------------------------
if __name__ == "__main__":
    key = jax.random.PRNGKey(0)
    inp = jax.random.normal(key, (2, 2, 14, 14), jnp.float32)  # batch=2, two 14x14 digits
    params = init_params(seed=42)

    # Default (perf) build: bf16 GEMM operands, f32 accumulation/epilogues.
    fwd_bf16 = jax.jit(functools.partial(compnet4_forward, compute_dtype=jnp.bfloat16))
    x, y, z = fwd_bf16(inp, params)
    jax.block_until_ready((x, y, z))
    assert x.shape == (2, 10) and y.shape == (2, 10) and z.shape == (2, 2)

    xr, yr, zr = _reference_forward(inp, params)

    # f32 build: tight tolerance -> catches any indexing / layout bug.
    fwd_f32 = jax.jit(functools.partial(compnet4_forward, compute_dtype=jnp.float32))
    x32, y32, _ = fwd_f32(inp, params)
    jax.block_until_ready((x32, y32))
    assert jnp.allclose(x32, xr, rtol=5e-3, atol=5e-3), "x logits mismatch (f32 build)"
    assert jnp.allclose(y32, yr, rtol=5e-3, atol=5e-3), "y logits mismatch (f32 build)"

    # bf16 build: looser numeric tolerance only.
    assert jnp.allclose(x, xr, rtol=2.5e-2, atol=2.5e-2), "x logits mismatch (bf16 build)"
    assert jnp.allclose(y, yr, rtol=2.5e-2, atol=2.5e-2), "y logits mismatch (bf16 build)"

    print("KERNEL_OK")
</pallas_src>

<mosaic_0001>
module attributes {stable_mosaic.version = 11 : i64} {
  func.func @_compnet4_kernel(%arg0: i32, %arg1: memref<128x64xbf16, #tpu.memory_space<vmem>>, %arg2: memref<4x64x128xbf16, #tpu.memory_space<vmem>>, %arg3: memref<1x128xf32, #tpu.memory_space<vmem>>, %arg4: memref<128x128xbf16, #tpu.memory_space<vmem>>, %arg5: memref<1x128xf32, #tpu.memory_space<vmem>>, %arg6: memref<4x128x128xbf16, #tpu.memory_space<vmem>>, %arg7: memref<1x128xf32, #tpu.memory_space<vmem>>, %arg8: memref<128x128xbf16, #tpu.memory_space<vmem>>, %arg9: memref<1x128xf32, #tpu.memory_space<vmem>>, %arg10: memref<128x128xbf16, #tpu.memory_space<vmem>>, %arg11: memref<1x128xf32, #tpu.memory_space<vmem>>, %arg12: memref<8x128xf32, #tpu.memory_space<vmem>>) attributes {dimension_semantics = [#tpu.dimension_semantics<parallel>], iteration_bounds = array<i64: 1>, scalar_prefetch = 0 : i64, scratch_operands = 0 : i64, tpu.core_type = #tpu.core_type<tc>, window_params = [{transform_indices = @transform_0, window_bounds = array<i64: 128, 64>}, {pipeline_mode = #tpu.pipeline_mode<synchronous>, transform_indices = @transform_1, window_bounds = array<i64: 4, 64, 128>}, {pipeline_mode = #tpu.pipeline_mode<synchronous>, transform_indices = @transform_2, window_bounds = array<i64: 1, 128>}, {pipeline_mode = #tpu.pipeline_mode<synchronous>, transform_indices = @transform_3, window_bounds = array<i64: 128, 128>}, {pipeline_mode = #tpu.pipeline_mode<synchronous>, transform_indices = @transform_4, window_bounds = array<i64: 1, 128>}, {pipeline_mode = #tpu.pipeline_mode<synchronous>, transform_indices = @transform_5, window_bounds = array<i64: 4, 128, 128>}, {pipeline_mode = #tpu.pipeline_mode<synchronous>, transform_indices = @transform_6, window_bounds = array<i64: 1, 128>}, {pipeline_mode = #tpu.pipeline_mode<synchronous>, transform_indices = @transform_7, window_bounds = array<i64: 128, 128>}, {pipeline_mode = #tpu.pipeline_mode<synchronous>, transform_indices = @transform_8, window_bounds = array<i64: 1, 128>}, {pipeline_mode = #tpu.pipeline_mode<synchronous>, transform_indices = @transform_9, window_bounds = array<i64: 128, 128>}, {pipeline_mode = #tpu.pipeline_mode<synchronous>, transform_indices = @transform_10, window_bounds = array<i64: 1, 128>}, {transform_indices = @transform_11, window_bounds = array<i64: 8, 128>}]} {
    %c0 = arith.constant 0 : index
    %c0_0 = arith.constant 0 : index
    %0 = vector.load %arg1[%c0, %c0_0] : memref<128x64xbf16, #tpu.memory_space<vmem>>, vector<128x64xbf16>
    %c0_1 = arith.constant 0 : index
    %c0_2 = arith.constant 0 : index
    %c0_3 = arith.constant 0 : index
    %1 = vector.load %arg2[%c0_1, %c0_2, %c0_3] : memref<4x64x128xbf16, #tpu.memory_space<vmem>>, vector<1x64x128xbf16>
    %2 = vector.shape_cast %1 : vector<1x64x128xbf16> to vector<64x128xbf16>
    %cst = arith.constant dense<0.000000e+00> : vector<128x128xf32>
    %3 = tpu.matmul %0, %2, %cst {dimension_numbers = #tpu.dot_dimension_numbers<[1], [0], [0], [1], [0, 0, 1, 1], [], []>} : vector<128x64xbf16>, vector<64x128xbf16>, vector<128x128xf32> -> vector<128x128xf32>
    %c1 = arith.constant 1 : index
    %c0_4 = arith.constant 0 : index
    %c0_5 = arith.constant 0 : index
    %4 = vector.load %arg2[%c1, %c0_4, %c0_5] : memref<4x64x128xbf16, #tpu.memory_space<vmem>>, vector<1x64x128xbf16>
    %5 = vector.shape_cast %4 : vector<1x64x128xbf16> to vector<64x128xbf16>
    %cst_6 = arith.constant dense<0.000000e+00> : vector<128x128xf32>
    %6 = tpu.matmul %0, %5, %cst_6 {dimension_numbers = #tpu.dot_dimension_numbers<[1], [0], [0], [1], [0, 0, 1, 1], [], []>} : vector<128x64xbf16>, vector<64x128xbf16>, vector<128x128xf32> -> vector<128x128xf32>
    %7 = arith.maximumf %3, %6 : vector<128x128xf32>
    %c2 = arith.constant 2 : index
    %c0_7 = arith.constant 0 : index
    %c0_8 = arith.constant 0 : index
    %8 = vector.load %arg2[%c2, %c0_7, %c0_8] : memref<4x64x128xbf16, #tpu.memory_space<vmem>>, vector<1x64x128xbf16>
    %9 = vector.shape_cast %8 : vector<1x64x128xbf16> to vector<64x128xbf16>
    %cst_9 = arith.constant dense<0.000000e+00> : vector<128x128xf32>
    %10 = tpu.matmul %0, %9, %cst_9 {dimension_numbers = #tpu.dot_dimension_numbers<[1], [0], [0], [1], [0, 0, 1, 1], [], []>} : vector<128x64xbf16>, vector<64x128xbf16>, vector<128x128xf32> -> vector<128x128xf32>
    %11 = arith.maximumf %7, %10 : vector<128x128xf32>
    %c3 = arith.constant 3 : index
    %c0_10 = arith.constant 0 : index
    %c0_11 = arith.constant 0 : index
    %12 = vector.load %arg2[%c3, %c0_10, %c0_11] : memref<4x64x128xbf16, #tpu.memory_space<vmem>>, vector<1x64x128xbf16>
    %13 = vector.shape_cast %12 : vector<1x64x128xbf16> to vector<64x128xbf16>
    %cst_12 = arith.constant dense<0.000000e+00> : vector<128x128xf32>
    %14 = tpu.matmul %0, %13, %cst_12 {dimension_numbers = #tpu.dot_dimension_numbers<[1], [0], [0], [1], [0, 0, 1, 1], [], []>} : vector<128x64xbf16>, vector<64x128xbf16>, vector<128x128xf32> -> vector<128x128xf32>
    %15 = arith.maximumf %11, %14 : vector<128x128xf32>
    %c0_13 = arith.constant 0 : index
    %c0_14 = arith.constant 0 : index
    %16 = vector.load %arg3[%c0_13, %c0_14] : memref<1x128xf32, #tpu.memory_space<vmem>>, vector<1x128xf32>
    %17 = vector.broadcast %16 : vector<1x128xf32> to vector<128x128xf32>
    %18 = arith.addf %15, %17 : vector<128x128xf32>
    %cst_15 = arith.constant 0.000000e+00 : f32
    %19 = vector.broadcast %cst_15 : f32 to vector<128x128xf32>
    %20 = arith.maximumf %18, %19 : vector<128x128xf32>
    %21 = arith.truncf %20 : vector<128x128xf32> to vector<128x128xbf16>
    %c0_16 = arith.constant 0 : index
    %c0_17 = arith.constant 0 : index
    %22 = vector.load %arg4[%c0_16, %c0_17] : memref<128x128xbf16, #tpu.memory_space<vmem>>, vector<128x128xbf16>
    %cst_18 = arith.constant dense<0.000000e+00> : vector<128x128xf32>
    %23 = tpu.matmul %21, %22, %cst_18 {dimension_numbers = #tpu.dot_dimension_numbers<[1], [0], [0], [1], [0, 0, 1, 1], [], []>} : vector<128x128xbf16>, vector<128x128xbf16>, vector<128x128xf32> -> vector<128x128xf32>
    %24 = vector.extract_strided_slice %23 {offsets = [0, 0], sizes = [32, 128], strides = [1, 1]} : vector<128x128xf32> to vector<32x128xf32>
    %25 = vector.extract_strided_slice %23 {offsets = [32, 0], sizes = [32, 128], strides = [1, 1]} : vector<128x128xf32> to vector<32x128xf32>
    %26 = vector.extract_strided_slice %23 {offsets = [64, 0], sizes = [32, 128], strides = [1, 1]} : vector<128x128xf32> to vector<32x128xf32>
    %27 = vector.extract_strided_slice %23 {offsets = [96, 0], sizes = [32, 128], strides = [1, 1]} : vector<128x128xf32> to vector<32x128xf32>
    %28 = arith.maximumf %24, %25 : vector<32x128xf32>
    %29 = arith.maximumf %26, %27 : vector<32x128xf32>
    %30 = arith.maximumf %28, %29 : vector<32x128xf32>
    %c0_19 = arith.constant 0 : index
    %c0_20 = arith.constant 0 : index
    %31 = vector.load %arg5[%c0_19, %c0_20] : memref<1x128xf32, #tpu.memory_space<vmem>>, vector<1x128xf32>
    %32 = vector.broadcast %31 : vector<1x128xf32> to vector<32x128xf32>
    %33 = arith.addf %30, %32 : vector<32x128xf32>
    %cst_21 = arith.constant 0.000000e+00 : f32
    %34 = vector.broadcast %cst_21 : f32 to vector<32x128xf32>
    %35 = arith.maximumf %33, %34 : vector<32x128xf32>
    %36 = arith.truncf %35 : vector<32x128xf32> to vector<32x128xbf16>
    %37 = vector.extract_strided_slice %36 {offsets = [0, 0], sizes = [8, 128], strides = [1, 1]} : vector<32x128xbf16> to vector<8x128xbf16>
    %c0_22 = arith.constant 0 : index
    %c0_23 = arith.constant 0 : index
    %c0_24 = arith.constant 0 : index
    %38 = vector.load %arg6[%c0_22, %c0_23, %c0_24] : memref<4x128x128xbf16, #tpu.memory_space<vmem>>, vector<1x128x128xbf16>
    %39 = vector.shape_cast %38 : vector<1x128x128xbf16> to vector<128x128xbf16>
    %cst_25 = arith.constant dense<0.000000e+00> : vector<8x128xf32>
    %40 = tpu.matmul %37, %39, %cst_25 {dimension_numbers = #tpu.dot_dimension_numbers<[1], [0], [0], [1], [0, 0, 1, 1], [], []>} : vector<8x128xbf16>, vector<128x128xbf16>, vector<8x128xf32> -> vector<8x128xf32>
    %41 = vector.extract_strided_slice %36 {offsets = [8, 0], sizes = [8, 128], strides = [1, 1]} : vector<32x128xbf16> to vector<8x128xbf16>
    %c1_26 = arith.constant 1 : index
    %c0_27 = arith.constant 0 : index
    %c0_28 = arith.constant 0 : index
    %42 = vector.load %arg6[%c1_26, %c0_27, %c0_28] : memref<4x128x128xbf16, #tpu.memory_space<vmem>>, vector<1x128x128xbf16>
    %43 = vector.shape_cast %42 : vector<1x128x128xbf16> to vector<128x128xbf16>
    %cst_29 = arith.constant dense<0.000000e+00> : vector<8x128xf32>
    %44 = tpu.matmul %41, %43, %cst_29 {dimension_numbers = #tpu.dot_dimension_numbers<[1], [0], [0], [1], [0, 0, 1, 1], [], []>} : vector<8x128xbf16>, vector<128x128xbf16>, vector<8x128xf32> -> vector<8x128xf32>
    %45 = arith.addf %40, %44 : vector<8x128xf32>
    %46 = vector.extract_strided_slice %36 {offsets = [16, 0], sizes = [8, 128], strides = [1, 1]} : vector<32x128xbf16> to vector<8x128xbf16>
    %c2_30 = arith.constant 2 : index
    %c0_31 = arith.constant 0 : index
    %c0_32 = arith.constant 0 : index
    %47 = vector.load %arg6[%c2_30, %c0_31, %c0_32] : memref<4x128x128xbf16, #tpu.memory_space<vmem>>, vector<1x128x128xbf16>
    %48 = vector.shape_cast %47 : vector<1x128x128xbf16> to vector<128x128xbf16>
    %cst_33 = arith.constant dense<0.000000e+00> : vector<8x128xf32>
    %49 = tpu.matmul %46, %48, %cst_33 {dimension_numbers = #tpu.dot_dimension_numbers<[1], [0], [0], [1], [0, 0, 1, 1], [], []>} : vector<8x128xbf16>, vector<128x128xbf16>, vector<8x128xf32> -> vector<8x128xf32>
    %50 = arith.addf %45, %49 : vector<8x128xf32>
    %51 = vector.extract_strided_slice %36 {offsets = [24, 0], sizes = [8, 128], strides = [1, 1]} : vector<32x128xbf16> to vector<8x128xbf16>
    %c3_34 = arith.constant 3 : index
    %c0_35 = arith.constant 0 : index
    %c0_36 = arith.constant 0 : index
    %52 = vector.load %arg6[%c3_34, %c0_35, %c0_36] : memref<4x128x128xbf16, #tpu.memory_space<vmem>>, vector<1x128x128xbf16>
    %53 = vector.shape_cast %52 : vector<1x128x128xbf16> to vector<128x128xbf16>
    %cst_37 = arith.constant dense<0.000000e+00> : vector<8x128xf32>
    %54 = tpu.matmul %51, %53, %cst_37 {dimension_numbers = #tpu.dot_dimension_numbers<[1], [0], [0], [1], [0, 0, 1, 1], [], []>} : vector<8x128xbf16>, vector<128x128xbf16>, vector<8x128xf32> -> vector<8x128xf32>
    %55 = arith.addf %50, %54 : vector<8x128xf32>
    %c0_38 = arith.constant 0 : index
    %c0_39 = arith.constant 0 : index
    %56 = vector.load %arg7[%c0_38, %c0_39] : memref<1x128xf32, #tpu.memory_space<vmem>>, vector<1x128xf32>
    %57 = vector.broadcast %56 : vector<1x128xf32> to vector<8x128xf32>
    %58 = arith.addf %55, %57 : vector<8x128xf32>
    %cst_40 = arith.constant 0.000000e+00 : f32
    %59 = vector.broadcast %cst_40 : f32 to vector<8x128xf32>
    %60 = arith.maximumf %58, %59 : vector<8x128xf32>
    %61 = arith.truncf %60 : vector<8x128xf32> to vector<8x128xbf16>
    %c0_41 = arith.constant 0 : index
    %c0_42 = arith.constant 0 : index
    %62 = vector.load %arg8[%c0_41, %c0_42] : memref<128x128xbf16, #tpu.memory_space<vmem>>, vector<128x128xbf16>
    %cst_43 = arith.constant dense<0.000000e+00> : vector<8x128xf32>
    %63 = tpu.matmul %61, %62, %cst_43 {dimension_numbers = #tpu.dot_dimension_numbers<[1], [0], [0], [1], [0, 0, 1, 1], [], []>} : vector<8x128xbf16>, vector<128x128xbf16>, vector<8x128xf32> -> vector<8x128xf32>
    %c0_44 = arith.constant 0 : index
    %c0_45 = arith.constant 0 : index
    %64 = vector.load %arg9[%c0_44, %c0_45] : memref<1x128xf32, #tpu.memory_space<vmem>>, vector<1x128xf32>
    %65 = vector.broadcast %64 : vector<1x128xf32> to vector<8x128xf32>
    %66 = arith.addf %63, %65 : vector<8x128xf32>
    %cst_46 = arith.constant 0.000000e+00 : f32
    %67 = vector.broadcast %cst_46 : f32 to vector<8x128xf32>
    %68 = arith.maximumf %66, %67 : vector<8x128xf32>
    %69 = arith.truncf %68 : vector<8x128xf32> to vector<8x128xbf16>
    %c0_47 = arith.constant 0 : index
    %c0_48 = arith.constant 0 : index
    %70 = vector.load %arg10[%c0_47, %c0_48] : memref<128x128xbf16, #tpu.memory_space<vmem>>, vector<128x128xbf16>
    %cst_49 = arith.constant dense<0.000000e+00> : vector<8x128xf32>
    %71 = tpu.matmul %69, %70, %cst_49 {dimension_numbers = #tpu.dot_dimension_numbers<[1], [0], [0], [1], [0, 0, 1, 1], [], []>} : vector<8x128xbf16>, vector<128x128xbf16>, vector<8x128xf32> -> vector<8x128xf32>
    %c0_50 = arith.constant 0 : index
    %c0_51 = arith.constant 0 : index
    %72 = vector.load %arg11[%c0_50, %c0_51] : memref<1x128xf32, #tpu.memory_space<vmem>>, vector<1x128xf32>
    %73 = vector.broadcast %72 : vector<1x128xf32> to vector<8x128xf32>
    %74 = arith.addf %71, %73 : vector<8x128xf32>
    %c0_52 = arith.constant 0 : index
    %c0_53 = arith.constant 0 : index
    %75 = vector.load %arg12[%c0_52, %c0_53] : memref<8x128xf32, #tpu.memory_space<vmem>>, vector<8x128xf32>
    tpu.vector_store %arg12[%c0_52, %c0_53], %74 {strides = array<i32>} : memref<8x128xf32, #tpu.memory_space<vmem>>, vector<8x128xf32>,
    return
  }
  func.func @transform_0(%arg0: i32) -> (i32, i32) {
    %c0_i32 = arith.constant 0 : i32
    %c0_i32_0 = arith.constant 0 : i32
    return %arg0, %c0_i32 : i32, i32
  }
  func.func @transform_1(%arg0: i32) -> (i32, i32, i32) {
    %c0_i32 = arith.constant 0 : i32
    %c0_i32_0 = arith.constant 0 : i32
    %c0_i32_1 = arith.constant 0 : i32
    %c0_i32_2 = arith.constant 0 : i32
    return %c0_i32, %c0_i32_0, %c0_i32_1 : i32, i32, i32
  }
  func.func @transform_2(%arg0: i32) -> (i32, i32) {
    %c0_i32 = arith.constant 0 : i32
    %c0_i32_0 = arith.constant 0 : i32
    %c0_i32_1 = arith.constant 0 : i32
    return %c0_i32, %c0_i32_0 : i32, i32
  }
  func.func @transform_3(%arg0: i32) -> (i32, i32) {
    %c0_i32 = arith.constant 0 : i32
    %c0_i32_0 = arith.constant 0 : i32
    %c0_i32_1 = arith.constant 0 : i32
    return %c0_i32, %c0_i32_0 : i32, i32
  }
  func.func @transform_4(%arg0: i32) -> (i32, i32) {
    %c0_i32 = arith.constant 0 : i32
    %c0_i32_0 = arith.constant 0 : i32
    %c0_i32_1 = arith.constant 0 : i32
    return %c0_i32, %c0_i32_0 : i32, i32
  }
  func.func @transform_5(%arg0: i32) -> (i32, i32, i32) {
    %c0_i32 = arith.constant 0 : i32
    %c0_i32_0 = arith.constant 0 : i32
    %c0_i32_1 = arith.constant 0 : i32
    %c0_i32_2 = arith.constant 0 : i32
    return %c0_i32, %c0_i32_0, %c0_i32_1 : i32, i32, i32
  }
  func.func @transform_6(%arg0: i32) -> (i32, i32) {
    %c0_i32 = arith.constant 0 : i32
    %c0_i32_0 = arith.constant 0 : i32
    %c0_i32_1 = arith.constant 0 : i32
    return %c0_i32, %c0_i32_0 : i32, i32
  }
  func.func @transform_7(%arg0: i32) -> (i32, i32) {
    %c0_i32 = arith.constant 0 : i32
    %c0_i32_0 = arith.constant 0 : i32
    %c0_i32_1 = arith.constant 0 : i32
    return %c0_i32, %c0_i32_0 : i32, i32
  }
  func.func @transform_8(%arg0: i32) -> (i32, i32) {
    %c0_i32 = arith.constant 0 : i32
    %c0_i32_0 = arith.constant 0 : i32
    %c0_i32_1 = arith.constant 0 : i32
    return %c0_i32, %c0_i32_0 : i32, i32
  }
  func.func @transform_9(%arg0: i32) -> (i32, i32) {
    %c0_i32 = arith.constant 0 : i32
    %c0_i32_0 = arith.constant 0 : i32
    %c0_i32_1 = arith.constant 0 : i32
    return %c0_i32, %c0_i32_0 : i32, i32
  }
  func.func @transform_10(%arg0: i32) -> (i32, i32) {
    %c0_i32 = arith.constant 0 : i32
    %c0_i32_0 = arith.constant 0 : i32
    %c0_i32_1 = arith.constant 0 : i32
    return %c0_i32, %c0_i32_0 : i32, i32
  }
  func.func @transform_11(%arg0: i32) -> (i32, i32) {
    %c0_i32 = arith.constant 0 : i32
    %c0_i32_0 = arith.constant 0 : i32
    return %arg0, %c0_i32 : i32, i32
  }
}

</mosaic_0001>

<llo_original>
// kernel: compnet4_forward.1
$region0: #{compnet4_forward.1}
  #allocation0 [shape = 'u32[]', space=smem, size = 0x4, offset = 0x4, fixed_abs, tag = 'smem constant byte address 0x4 - core index']
  #allocation1 [shape = 'u32[144,128]{1,0:T(1,128)}', space=vmem, size = 0x12000, scoped, tag = 'internal scratch']
  %s0 = inlined_call_operand.vmem [shape: bf16[128,64], index: 0, kind: input, shape index: {}]
  %s1 = inlined_call_operand.vmem [shape: bf16[4,64,128], index: 1, kind: input, shape index: {}]
  %s2 = inlined_call_operand.vmem [shape: f32[1,128], index: 2, kind: input, shape index: {}]
  %s3 = inlined_call_operand.vmem [shape: bf16[128,128], index: 3, kind: input, shape index: {}]
  %s4 = inlined_call_operand.vmem [shape: f32[1,128], index: 4, kind: input, shape index: {}]
  %s5 = inlined_call_operand.vmem [shape: bf16[4,128,128], index: 5, kind: input, shape index: {}]
  %s6 = inlined_call_operand.vmem [shape: f32[1,128], index: 6, kind: input, shape index: {}]
  %s7 = inlined_call_operand.vmem [shape: bf16[128,128], index: 7, kind: input, shape index: {}]
  %s8 = inlined_call_operand.vmem [shape: f32[1,128], index: 8, kind: input, shape index: {}]
  %s9 = inlined_call_operand.vmem [shape: bf16[128,128], index: 9, kind: input, shape index: {}]
  %s10 = inlined_call_operand.vmem [shape: f32[1,128], index: 10, kind: input, shape index: {}]
  %s11 = inlined_call_operand.vmem [shape: f32[8,128], index: 11, kind: output, shape index: {}]
  %s12 = sld [smem:[#allocation0]]
  $region54: #{compnet4_forward.1} parent=0
    _
  %s14 = ssub.s32 1, %s12
  %s15 = scalar_select 0, %s14, %s12
  // Predicated region
  $region2: #{compnet4_forward.1} parent=0 // pred_check
    _
  $region3: #{compnet4_forward.1} parent=0 // pred_check_branch
    %17 = sbr.rel (0) target = $region5
  $region4: #{compnet4_forward.1} parent=0 // pred_region
    _
  $region5: #{compnet4_forward.1} parent=0 // pred_fallthru
    _
  // Predicated region
  $region6: #{compnet4_forward.1} parent=0 // pred_check
    _
  $region7: #{compnet4_forward.1} parent=0 // pred_check_branch
    %19 = sbr.rel (0) target = $region9
  $region8: #{compnet4_forward.1} parent=0 // pred_region
    _
  $region9: #{compnet4_forward.1} parent=0 // pred_fallthru
    _
  // Predicated region
  $region10: #{compnet4_forward.1} parent=0 // pred_check
    _
  $region11: #{compnet4_forward.1} parent=0 // pred_check_branch
    %21 = sbr.rel (0) target = $region13
  $region12: #{compnet4_forward.1} parent=0 // pred_region
    _
  $region13: #{compnet4_forward.1} parent=0 // pred_fallthru
    _
  // Predicated region
  $region14: #{compnet4_forward.1} parent=0 // pred_check
    _
  $region15: #{compnet4_forward.1} parent=0 // pred_check_branch
    %23 = sbr.rel (0) target = $region17
  $region16: #{compnet4_forward.1} parent=0 // pred_region
    _
  $region17: #{compnet4_forward.1} parent=0 // pred_fallthru
    _
  // Predicated region
  $region18: #{compnet4_forward.1} parent=0 // pred_check
    _
  $region19: #{compnet4_forward.1} parent=0 // pred_check_branch
    %25 = sbr.rel (0) target = $region21
  $region20: #{compnet4_forward.1} parent=0 // pred_region
    _
  $region21: #{compnet4_forward.1} parent=0 // pred_fallthru
    _
  // Predicated region
  $region22: #{compnet4_forward.1} parent=0 // pred_check
    _
  $region23: #{compnet4_forward.1} parent=0 // pred_check_branch
    %27 = sbr.rel (0) target = $region25
  $region24: #{compnet4_forward.1} parent=0 // pred_region
    _
  $region25: #{compnet4_forward.1} parent=0 // pred_fallthru
    _
  // Predicated region
  $region26: #{compnet4_forward.1} parent=0 // pred_check
    _
  $region27: #{compnet4_forward.1} parent=0 // pred_check_branch
    %29 = sbr.rel (0) target = $region29
  $region28: #{compnet4_forward.1} parent=0 // pred_region
    _
  $region29: #{compnet4_forward.1} parent=0 // pred_fallthru
    _
  // Predicated region
  $region30: #{compnet4_forward.1} parent=0 // pred_check
    _
  $region31: #{compnet4_forward.1} parent=0 // pred_check_branch
    %31 = sbr.rel (0) target = $region33
  $region32: #{compnet4_forward.1} parent=0 // pred_region
    _
  $region33: #{compnet4_forward.1} parent=0 // pred_fallthru
    _
  // Predicated region
  $region34: #{compnet4_forward.1} parent=0 // pred_check
    _
  $region35: #{compnet4_forward.1} parent=0 // pred_check_branch
    %33 = sbr.rel (0) target = $region37
  $region36: #{compnet4_forward.1} parent=0 // pred_region
    _
  $region37: #{compnet4_forward.1} parent=0 // pred_fallthru
    _
  // Predicated region
  $region38: #{compnet4_forward.1} parent=0 // pred_check
    _
  $region39: #{compnet4_forward.1} parent=0 // pred_check_branch
    %35 = sbr.rel (0) target = $region41
  $region40: #{compnet4_forward.1} parent=0 // pred_region
    _
  $region41: #{compnet4_forward.1} parent=0 // pred_fallthru
    _
  // Predicated region
  $region42: #{compnet4_forward.1} parent=0 // pred_check
    _
  $region43: #{compnet4_forward.1} parent=0 // pred_check_branch
    %37 = sbr.rel (0) target = $region45
  $region44: #{compnet4_forward.1} parent=0 // pred_region
    _
  $region45: #{compnet4_forward.1} parent=0 // pred_fallthru
    _
  %v39 = vld [vmem:[%s0] sm:$0xf]
  %v40 = vld [vmem:[%s0 + $0x4] sm:$0xf]
  %v41 = vld [vmem:[%s0 + $0x8] sm:$0xf]
  %v42 = vld [vmem:[%s0 + $0xc] sm:$0xf]
  %v43 = vld [vmem:[%s0 + $0x10] sm:$0xf]
  %v44 = vld [vmem:[%s0 + $0x14] sm:$0xf]
  %v45 = vld [vmem:[%s0 + $0x18] sm:$0xf]
  %v46 = vld [vmem:[%s0 + $0x1c] sm:$0xf]
  %v47 = vld [vmem:[%s0 + $0x20] sm:$0xf]
  %v48 = vld [vmem:[%s0 + $0x24] sm:$0xf]
  %v49 = vld [vmem:[%s0 + $0x28] sm:$0xf]
  %v50 = vld [vmem:[%s0 + $0x2c] sm:$0xf]
  %v51 = vld [vmem:[%s0 + $0x30] sm:$0xf]
  %v52 = vld [vmem:[%s0 + $0x34] sm:$0xf]
  %v53 = vld [vmem:[%s0 + $0x38] sm:$0xf]
  %v54 = vld [vmem:[%s0 + $0x3c] sm:$0xf]
  %v55 = vld [vmem:[%s1] sm:$0xf]
  %v56 = vld [vmem:[%s1 + $0x4] sm:$0xf]
  %v57 = vld [vmem:[%s1 + $0x8] sm:$0xf]
  %v58 = vld [vmem:[%s1 + $0xc] sm:$0xf]
  %v59 = vld [vmem:[%s1 + $0x10] sm:$0xf]
  %v60 = vld [vmem:[%s1 + $0x14] sm:$0xf]
  %v61 = vld [vmem:[%s1 + $0x18] sm:$0xf]
  %v62 = vld [vmem:[%s1 + $0x1c] sm:$0xf]
  %v79 = vunpack.c.l.b16 %v39
  %v80 = vunpack.c.l.b16 %v40
  %v81 = vunpack.c.l.b16 %v41
  %v82 = vunpack.c.l.b16 %v42
  %v83 = vunpack.c.l.b16 %v43
  %v84 = vunpack.c.l.b16 %v44
  %v85 = vunpack.c.l.b16 %v45
  %v86 = vunpack.c.l.b16 %v46
  %v87 = vunpack.c.l.b16 %v47
  %v88 = vunpack.c.l.b16 %v48
  %v89 = vunpack.c.l.b16 %v49
  %v90 = vunpack.c.l.b16 %v50
  %v91 = vunpack.c.l.b16 %v51
  %v92 = vunpack.c.l.b16 %v52
  %v93 = vunpack.c.l.b16 %v53
  %v94 = vunpack.c.l.b16 %v54
  %v95 = vpack.c.b16 %v80, %v79
  %v96 = vpack.c.b16 %v82, %v81
  %v97 = vpack.c.b16 %v84, %v83
  %v98 = vpack.c.b16 %v86, %v85
  %v99 = vpack.c.b16 %v88, %v87
  %v100 = vpack.c.b16 %v90, %v89
  %v101 = vpack.c.b16 %v92, %v91
  %v102 = vpack.c.b16 %v94, %v93
  %v111 = vunpack.c.l.b16 %v55
  %v112 = vunpack.c.l.b16 %v56
  %v113 = vunpack.c.l.b16 %v57
  %v114 = vunpack.c.l.b16 %v58
  %v115 = vunpack.c.l.b16 %v59
  %v116 = vunpack.c.l.b16 %v60
  %v117 = vunpack.c.l.b16 %v61
  %v118 = vunpack.c.l.b16 %v62
  %v119 = vpack.c.b16 %v112, %v111
  %v120 = vpack.c.b16 %v114, %v113
  %v121 = vpack.c.b16 %v116, %v115
  %v122 = vpack.c.b16 %v118, %v117
  %vm127 = vcmask 523264
  %v129 = vsel %vm127, %v95, 0
  %v132 = vsel %vm127, %v96, 0
  %v135 = vsel %vm127, %v97, 0
  %v138 = vsel %vm127, %v98, 0
  %v141 = vsel %vm127, %v99, 0
  %v144 = vsel %vm127, %v100, 0
  %v147 = vsel %vm127, %v101, 0
  %v150 = vsel %vm127, %v102, 0
  %152 = vmatprep.subr.bf16.mxu0 0
  %153 = vmatpush1.bf16.msra.mxu0 %v119
  %154 = vmatprep.subr.bf16.mxu0 0
  %155 = vmatpush1.bf16.msra.mxu0 %v120
  %156 = vmatprep.subr.bf16.mxu0 0
  %157 = vmatpush1.bf16.msra.mxu0 %v121
  %158 = vmatprep.subr.bf16.mxu0 0
  %159 = vmatpush1.bf16.msra.mxu0 %v122
  %160 = vmatprep.subr.bf16.mxu0 0
  %161 = vmatpush1.bf16.msra.mxu0 0
  %162 = vmatprep.subr.bf16.mxu0 0
  %163 = vmatpush1.bf16.msra.mxu0 0
  %164 = vmatprep.subr.bf16.mxu0 0
  %165 = vmatpush1.bf16.msra.mxu0 0
  %166 = vmatprep.subr.bf16.mxu0 0
  %167 = vmatpush1.bf16.msra.mxu0 0
  %168 = vmatprep.subr.bf16.mxu0 0
  %169 = vmatpush1.bf16.msra.mxu0 0
  %170 = vmatprep.subr.bf16.mxu0 0
  %171 = vmatpush1.bf16.msra.mxu0 0
  %172 = vmatprep.subr.bf16.mxu0 0
  %173 = vmatpush1.bf16.msra.mxu0 0
  %174 = vmatprep.subr.bf16.mxu0 0
  %175 = vmatpush1.bf16.msra.mxu0 0
  %176 = vmatprep.subr.bf16.mxu0 0
  %177 = vmatpush1.bf16.msra.mxu0 0
  %178 = vmatprep.subr.bf16.mxu0 0
  %179 = vmatpush1.bf16.msra.mxu0 0
  %180 = vmatprep.subr.bf16.mxu0 0
  %181 = vmatpush1.bf16.msra.mxu0 0
  %182 = vmatprep.subr.bf16.mxu0 0
  %183 = vmatpush1.bf16.msra.mxu0 0
  %184 = vmatprep.mubr.bf16.mxu0 0
  %185 = vmatmul.mubr.bf16.gmra.mrb[0].mxu0 %v129
  %v186 = vpop.f32.mrb[0].mxu0
  %v187 = vadd.f32 0.0, %v186
  %v188 = vpop.f32.mrb[0].mxu0
  %v189 = vpop.f32.mrb[0].mxu0
  %v190 = vadd.f32 0.0, %v189
  %v191 = vpop.f32.mrb[0].mxu0
  %192 = vmatprep.mubr.bf16.mxu0 0
  %193 = vmatmul.mubr.bf16.gmra.mrb[0].mxu0 %v132
  %v194 = vpop.f32.mrb[0].mxu0
  %v195 = vadd.f32 0.0, %v194
  %v196 = vpop.f32.mrb[0].mxu0
  %v197 = vpop.f32.mrb[0].mxu0
  %v198 = vadd.f32 0.0, %v197
  %v199 = vpop.f32.mrb[0].mxu0
  %200 = vmatprep.mubr.bf16.mxu0 0
  %201 = vmatmul.mubr.bf16.gmra.mrb[0].mxu0 %v135
  %v202 = vpop.f32.mrb[0].mxu0
  %v203 = vadd.f32 0.0, %v202
  %v204 = vpop.f32.mrb[0].mxu0
  %v205 = vpop.f32.mrb[0].mxu0
  %v206 = vadd.f32 0.0, %v205
  %v207 = vpop.f32.mrb[0].mxu0
  %208 = vmatprep.mubr.bf16.mxu0 0
  %209 = vmatmul.mubr.bf16.gmra.mrb[0].mxu0 %v138
  %v210 = vpop.f32.mrb[0].mxu0
  %v211 = vadd.f32 0.0, %v210
  %v212 = vpop.f32.mrb[0].mxu0
  %v213 = vpop.f32.mrb[0].mxu0
  %v214 = vadd.f32 0.0, %v213
  %v215 = vpop.f32.mrb[0].mxu0
  %216 = vmatprep.mubr.bf16.mxu0 0
  %217 = vmatmul.mubr.bf16.gmra.mrb[0].mxu0 %v141
  %v218 = vpop.f32.mrb[0].mxu0
  %v219 = vadd.f32 0.0, %v218
  %v220 = vpop.f32.mrb[0].mxu0
  %v221 = vpop.f32.mrb[0].mxu0
  %v222 = vadd.f32 0.0, %v221
  %v223 = vpop.f32.mrb[0].mxu0
  %224 = vmatprep.mubr.bf16.mxu0 0
  %225 = vmatmul.mubr.bf16.gmra.mrb[0].mxu0 %v144
  %v226 = vpop.f32.mrb[0].mxu0
  %v227 = vadd.f32 0.0, %v226
  %v228 = vpop.f32.mrb[0].mxu0
  %v229 = vpop.f32.mrb[0].mxu0
  %v230 = vadd.f32 0.0, %v229
  %v231 = vpop.f32.mrb[0].mxu0
  %232 = vmatprep.mubr.bf16.mxu0 0
  %233 = vmatmul.mubr.bf16.gmra.mrb[0].mxu0 %v147
  %v234 = vpop.f32.mrb[0].mxu0
  %v235 = vadd.f32 0.0, %v234
  %v236 = vpop.f32.mrb[0].mxu0
  %v237 = vpop.f32.mrb[0].mxu0
  %v238 = vadd.f32 0.0, %v237
  %v239 = vpop.f32.mrb[0].mxu0
  %240 = vmatprep.mubr.bf16.mxu0 0
  %241 = vmatmul.mubr.bf16.gmra.mrb[0].mxu0 %v150
  %v242 = vpop.f32.mrb[0].mxu0
  %v243 = vadd.f32 0.0, %v242
  %v244 = vpop.f32.mrb[0].mxu0
  %v245 = vpop.f32.mrb[0].mxu0
  %v246 = vadd.f32 0.0, %v245
  %v247 = vpop.f32.mrb[0].mxu0
  %248 = vdwg.mxu0
  %s249 = scalar_lea.vmem %s1, 32
  %v250 = vld [vmem:[%s249] sm:$0xf]
  %v251 = vld [vmem:[%s249 + $0x4] sm:$0xf]
  %v252 = vld [vmem:[%s249 + $0x8] sm:$0xf]
  %v253 = vld [vmem:[%s249 + $0xc] sm:$0xf]
  %v254 = vld [vmem:[%s249 + $0x10] sm:$0xf]
  %v255 = vld [vmem:[%s249 + $0x14] sm:$0xf]
  %v256 = vld [vmem:[%s249 + $0x18] sm:$0xf]
  %v257 = vld [vmem:[%s249 + $0x1c] sm:$0xf]
  %v266 = vunpack.c.l.b16 %v250
  %v267 = vunpack.c.l.b16 %v251
  %v268 = vunpack.c.l.b16 %v252
  %v269 = vunpack.c.l.b16 %v253
  %v270 = vunpack.c.l.b16 %v254
  %v271 = vunpack.c.l.b16 %v255
  %v272 = vunpack.c.l.b16 %v256
  %v273 = vunpack.c.l.b16 %v257
  %v274 = vpack.c.b16 %v267, %v266
  %v275 = vpack.c.b16 %v269, %v268
  %v276 = vpack.c.b16 %v271, %v270
  %v277 = vpack.c.b16 %v273, %v272
  %282 = vmatprep.subr.bf16.mxu0 0
  %283 = vmatpush1.bf16.msra.mxu0 %v274
  %284 = vmatprep.subr.bf16.mxu0 0
  %285 = vmatpush1.bf16.msra.mxu0 %v275
  %286 = vmatprep.subr.bf16.mxu0 0
  %287 = vmatpush1.bf16.msra.mxu0 %v276
  %288 = vmatprep.subr.bf16.mxu0 0
  %289 = vmatpush1.bf16.msra.mxu0 %v277
  %290 = vmatprep.subr.bf16.mxu0 0
  %291 = vmatpush1.bf16.msra.mxu0 0
  %292 = vmatprep.subr.bf16.mxu0 0
  %293 = vmatpush1.bf16.msra.mxu0 0
  %294 = vmatprep.subr.bf16.mxu0 0
  %295 = vmatpush1.bf16.msra.mxu0 0
  %296 = vmatprep.subr.bf16.mxu0 0
  %297 = vmatpush1.bf16.msra.mxu0 0
  %298 = vmatprep.subr.bf16.mxu0 0
  %299 = vmatpush1.bf16.msra.mxu0 0
  %300 = vmatprep.subr.bf16.mxu0 0
  %301 = vmatpush1.bf16.msra.mxu0 0
  %302 = vmatprep.subr.bf16.mxu0 0
  %303 = vmatpush1.bf16.msra.mxu0 0
  %304 = vmatprep.subr.bf16.mxu0 0
  %305 = vmatpush1.bf16.msra.mxu0 0
  %306 = vmatprep.subr.bf16.mxu0 0
  %307 = vmatpush1.bf16.msra.mxu0 0
  %308 = vmatprep.subr.bf16.mxu0 0
  %309 = vmatpush1.bf16.msra.mxu0 0
  %310 = vmatprep.subr.bf16.mxu0 0
  %311 = vmatpush1.bf16.msra.mxu0 0
  %312 = vmatprep.subr.bf16.mxu0 0
  %313 = vmatpush1.bf16.msra.mxu0 0
  %314 = vmatprep.mubr.bf16.mxu0 0
  %315 = vmatmul.mubr.bf16.gmra.mrb[0].mxu0 %v129
  %v316 = vpop.f32.mrb[0].mxu0
  %v317 = vadd.f32 0.0, %v316
  %v318 = vpop.f32.mrb[0].mxu0
  %v319 = vpop.f32.mrb[0].mxu0
  %v320 = vadd.f32 0.0, %v319
  %v321 = vpop.f32.mrb[0].mxu0
  %322 = vmatprep.mubr.bf16.mxu0 0
  %323 = vmatmul.mubr.bf16.gmra.mrb[0].mxu0 %v132
  %v324 = vpop.f32.mrb[0].mxu0
  %v325 = vadd.f32 0.0, %v324
  %v326 = vpop.f32.mrb[0].mxu0
  %v327 = vpop.f32.mrb[0].mxu0
  %v328 = vadd.f32 0.0, %v327
  %v329 = vpop.f32.mrb[0].mxu0
  %330 = vmatprep.mubr.bf16.mxu0 0
  %331 = vmatmul.mubr.bf16.gmra.mrb[0].mxu0 %v135
  %v332 = vpop.f32.mrb[0].mxu0
  %v333 = vadd.f32 0.0, %v332
  %v334 = vpop.f32.mrb[0].mxu0
  %v335 = vpop.f32.mrb[0].mxu0
  %v336 = vadd.f32 0.0, %v335
  %v337 = vpop.f32.mrb[0].mxu0
  %338 = vmatprep.mubr.bf16.mxu0 0
  %339 = vmatmul.mubr.bf16.gmra.mrb[0].mxu0 %v138
  %v340 = vpop.f32.mrb[0].mxu0
  %v341 = vadd.f32 0.0, %v340
  %v342 = vpop.f32.mrb[0].mxu0
  %v343 = vpop.f32.mrb[0].mxu0
  %v344 = vadd.f32 0.0, %v343
  %v345 = vpop.f32.mrb[0].mxu0
  %346 = vmatprep.mubr.bf16.mxu0 0
  %347 = vmatmul.mubr.bf16.gmra.mrb[0].mxu0 %v141
  %v348 = vpop.f32.mrb[0].mxu0
  %v349 = vadd.f32 0.0, %v348
  %v350 = vpop.f32.mrb[0].mxu0
  %v351 = vpop.f32.mrb[0].mxu0
  %v352 = vadd.f32 0.0, %v351
  %v353 = vpop.f32.mrb[0].mxu0
  %354 = vmatprep.mubr.bf16.mxu0 0
  %355 = vmatmul.mubr.bf16.gmra.mrb[0].mxu0 %v144
  %v356 = vpop.f32.mrb[0].mxu0
  %v357 = vadd.f32 0.0, %v356
  %v358 = vpop.f32.mrb[0].mxu0
  %v359 = vpop.f32.mrb[0].mxu0
  %v360 = vadd.f32 0.0, %v359
  %v361 = vpop.f32.mrb[0].mxu0
  %362 = vmatprep.mubr.bf16.mxu0 0
  %363 = vmatmul.mubr.bf16.gmra.mrb[0].mxu0 %v147
  %v364 = vpop.f32.mrb[0].mxu0
  %v365 = vadd.f32 0.0, %v364
  %v366 = vpop.f32.mrb[0].mxu0
  %v367 = vpop.f32.mrb[0].mxu0
  %v368 = vadd.f32 0.0, %v367
  %v369 = vpop.f32.mrb[0].mxu0
  %370 = vmatprep.mubr.bf16.mxu0 0
  %371 = vmatmul.mubr.bf16.gmra.mrb[0].mxu0 %v150
  %v372 = vpop.f32.mrb[0].mxu0
  %v373 = vadd.f32 0.0, %v372
  %v374 = vpop.f32.mrb[0].mxu0
  %v375 = vpop.f32.mrb[0].mxu0
  %v376 = vadd.f32 0.0, %v375
  %v377 = vpop.f32.mrb[0].mxu0
  %378 = vdwg.mxu0
  %v379 = vmax.f32 %v187, %v317
  %v380 = vmax.f32 %v190, %v320
  %v381 = vmax.f32 %v195, %v325
  %v382 = vmax.f32 %v198, %v328
  %v383 = vmax.f32 %v203, %v333
  %v384 = vmax.f32 %v206, %v336
  %v385 = vmax.f32 %v211, %v341
  %v386 = vmax.f32 %v214, %v344
  %v387 = vmax.f32 %v219, %v349
  %v388 = vmax.f32 %v222, %v352
  %v389 = vmax.f32 %v227, %v357
  %v390 = vmax.f32 %v230, %v360
  %v391 = vmax.f32 %v235, %v365
  %v392 = vmax.f32 %v238, %v368
  %v393 = vmax.f32 %v243, %v373
  %v394 = vmax.f32 %v246, %v376
  %s395 = scalar_lea.vmem %s1, 64
  %v396 = vld [vmem:[%s395] sm:$0xf]
  %v397 = vld [vmem:[%s395 + $0x4] sm:$0xf]
  %v398 = vld [vmem:[%s395 + $0x8] sm:$0xf]
  %v399 = vld [vmem:[%s395 + $0xc] sm:$0xf]
  %v400 = vld [vmem:[%s395 + $0x10] sm:$0xf]
  %v401 = vld [vmem:[%s395 + $0x14] sm:$0xf]
  %v402 = vld [vmem:[%s395 + $0x18] sm:$0xf]
  %v403 = vld [vmem:[%s395 + $0x1c] sm:$0xf]
  %v412 = vunpack.c.l.b16 %v396
  %v413 = vunpack.c.l.b16 %v397
  %v414 = vunpack.c.l.b16 %v398
  %v415 = vunpack.c.l.b16 %v399
  %v416 = vunpack.c.l.b16 %v400
  %v417 = vunpack.c.l.b16 %v401
  %v418 = vunpack.c.l.b16 %v402
  %v419 = vunpack.c.l.b16 %v403
  %v420 = vpack.c.b16 %v413, %v412
  %v421 = vpack.c.b16 %v415, %v414
  %v422 = vpack.c.b16 %v417, %v416
  %v423 = vpack.c.b16 %v419, %v418
  %428 = vmatprep.subr.bf16.mxu0 0
  %429 = vmatpush1.bf16.msra.mxu0 %v420
  %430 = vmatprep.subr.bf16.mxu0 0
  %431 = vmatpush1.bf16.msra.mxu0 %v421
  %432 = vmatprep.subr.bf16.mxu0 0
  %433 = vmatpush1.bf16.msra.mxu0 %v422
  %434 = vmatprep.subr.bf16.mxu0 0
  %435 = vmatpush1.bf16.msra.mxu0 %v423
  %436 = vmatprep.subr.bf16.mxu0 0
  %437 = vmatpush1.bf16.msra.mxu0 0
  %438 = vmatprep.subr.bf16.mxu0 0
  %439 = vmatpush1.bf16.msra.mxu0 0
  %440 = vmatprep.subr.bf16.mxu0 0
  %441 = vmatpush1.bf16.msra.mxu0 0
  %442 = vmatprep.subr.bf16.mxu0 0
  %443 = vmatpush1.bf16.msra.mxu0 0
  %444 = vmatprep.subr.bf16.mxu0 0
  %445 = vmatpush1.bf16.msra.mxu0 0
  %446 = vmatprep.subr.bf16.mxu0 0
  %447 = vmatpush1.bf16.msra.mxu0 0
  %448 = vmatprep.subr.bf16.mxu0 0
  %449 = vmatpush1.bf16.msra.mxu0 0
  %450 = vmatprep.subr.bf16.mxu0 0
  %451 = vmatpush1.bf16.msra.mxu0 0
  %452 = vmatprep.subr.bf16.mxu0 0
  %453 = vmatpush1.bf16.msra.mxu0 0
  %454 = vmatprep.subr.bf16.mxu0 0
  %455 = vmatpush1.bf16.msra.mxu0 0
  %456 = vmatprep.subr.bf16.mxu0 0
  %457 = vmatpush1.bf16.msra.mxu0 0
  %458 = vmatprep.subr.bf16.mxu0 0
  %459 = vmatpush1.bf16.msra.mxu0 0
  %460 = vmatprep.mubr.bf16.mxu0 0
  %461 = vmatmul.mubr.bf16.gmra.mrb[0].mxu0 %v129
  %v462 = vpop.f32.mrb[0].mxu0
  %v463 = vadd.f32 0.0, %v462
  %v464 = vpop.f32.mrb[0].mxu0
  %v465 = vpop.f32.mrb[0].mxu0
  %v466 = vadd.f32 0.0, %v465
  %v467 = vpop.f32.mrb[0].mxu0
  %468 = vmatprep.mubr.bf16.mxu0 0
  %469 = vmatmul.mubr.bf16.gmra.mrb[0].mxu0 %v132
  %v470 = vpop.f32.mrb[0].mxu0
  %v471 = vadd.f32 0.0, %v470
  %v472 = vpop.f32.mrb[0].mxu0
  %v473 = vpop.f32.mrb[0].mxu0
  %v474 = vadd.f32 0.0, %v473
  %v475 = vpop.f32.mrb[0].mxu0
  %476 = vmatprep.mubr.bf16.mxu0 0
  %477 = vmatmul.mubr.bf16.gmra.mrb[0].mxu0 %v135
  %v478 = vpop.f32.mrb[0].mxu0
  %v479 = vadd.f32 0.0, %v478
  %v480 = vpop.f32.mrb[0].mxu0
  %v481 = vpop.f32.mrb[0].mxu0
  %v482 = vadd.f32 0.0, %v481
  %v483 = vpop.f32.mrb[0].mxu0
  %484 = vmatprep.mubr.bf16.mxu0 0
  %485 = vmatmul.mubr.bf16.gmra.mrb[0].mxu0 %v138
  %v486 = vpop.f32.mrb[0].mxu0
  %v487 = vadd.f32 0.0, %v486
  %v488 = vpop.f32.mrb[0].mxu0
  %v489 = vpop.f32.mrb[0].mxu0
  %v490 = vadd.f32 0.0, %v489
  %v491 = vpop.f32.mrb[0].mxu0
  %492 = vmatprep.mubr.bf16.mxu0 0
  %493 = vmatmul.mubr.bf16.gmra.mrb[0].mxu0 %v141
  %v494 = vpop.f32.mrb[0].mxu0
  %v495 = vadd.f32 0.0, %v494
  %v496 = vpop.f32.mrb[0].mxu0
  %v497 = vpop.f32.mrb[0].mxu0
  %v498 = vadd.f32 0.0, %v497
  %v499 = vpop.f32.mrb[0].mxu0
  %500 = vmatprep.mubr.bf16.mxu0 0
  %501 = vmatmul.mubr.bf16.gmra.mrb[0].mxu0 %v144
  %v502 = vpop.f32.mrb[0].mxu0
  %v503 = vadd.f32 0.0, %v502
  %v504 = vpop.f32.mrb[0].mxu0
  %v505 = vpop.f32.mrb[0].mxu0
  %v506 = vadd.f32 0.0, %v505
  %v507 = vpop.f32.mrb[0].mxu0
  %508 = vmatprep.mubr.bf16.mxu0 0
  %509 = vmatmul.mubr.bf16.gmra.mrb[0].mxu0 %v147
  %v510 = vpop.f32.mrb[0].mxu0
  %v511 = vadd.f32 0.0, %v510
  %v512 = vpop.f32.mrb[0].mxu0
  %v513 = vpop.f32.mrb[0].mxu0
  %v514 = vadd.f32 0.0, %v513
  %v515 = vpop.f32.mrb[0].mxu0
  %516 = vmatprep.mubr.bf16.mxu0 0
  %517 = vmatmul.mubr.bf16.gmra.mrb[0].mxu0 %v150
  %v518 = vpop.f32.mrb[0].mxu0
  %v519 = vadd.f32 0.0, %v518
  %v520 = vpop.f32.mrb[0].mxu0
  %v521 = vpop.f32.mrb[0].mxu0
  %v522 = vadd.f32 0.0, %v521
  %v523 = vpop.f32.mrb[0].mxu0
  %524 = vdwg.mxu0
  %v525 = vmax.f32 %v379, %v463
  %v526 = vmax.f32 %v380, %v466
  %v527 = vmax.f32 %v381, %v471
  %v528 = vmax.f32 %v382, %v474
  %v529 = vmax.f32 %v383, %v479
  %v530 = vmax.f32 %v384, %v482
  %v531 = vmax.f32 %v385, %v487
  %v532 = vmax.f32 %v386, %v490
  %v533 = vmax.f32 %v387, %v495
  %v534 = vmax.f32 %v388, %v498
  %v535 = vmax.f32 %v389, %v503
  %v536 = vmax.f32 %v390, %v506
  %v537 = vmax.f32 %v391, %v511
  %v538 = vmax.f32 %v392, %v514
  %v539 = vmax.f32 %v393, %v519
  %v540 = vmax.f32 %v394, %v522
  %s541 = scalar_lea.vmem %s1, 96
  %v542 = vld [vmem:[%s541] sm:$0xf]
  %v543 = vld [vmem:[%s541 + $0x4] sm:$0xf]
  %v544 = vld [vmem:[%s541 + $0x8] sm:$0xf]
  %v545 = vld [vmem:[%s541 + $0xc] sm:$0xf]
  %v546 = vld [vmem:[%s541 + $0x10] sm:$0xf]
  %v547 = vld [vmem:[%s541 + $0x14] sm:$0xf]
  %v548 = vld [vmem:[%s541 + $0x18] sm:$0xf]
  %v549 = vld [vmem:[%s541 + $0x1c] sm:$0xf]
  %v558 = vunpack.c.l.b16 %v542
  %v559 = vunpack.c.l.b16 %v543
  %v560 = vunpack.c.l.b16 %v544
  %v561 = vunpack.c.l.b16 %v545
  %v562 = vunpack.c.l.b16 %v546
  %v563 = vunpack.c.l.b16 %v547
  %v564 = vunpack.c.l.b16 %v548
  %v565 = vunpack.c.l.b16 %v549
  %v566 = vpack.c.b16 %v559, %v558
  %v567 = vpack.c.b16 %v561, %v560
  %v568 = vpack.c.b16 %v563, %v562
  %v569 = vpack.c.b16 %v565, %v564
  %574 = vmatprep.subr.bf16.mxu0 0
  %575 = vmatpush1.bf16.msra.mxu0 %v566
  %576 = vmatprep.subr.bf16.mxu0 0
  %577 = vmatpush1.bf16.msra.mxu0 %v567
  %578 = vmatprep.subr.bf16.mxu0 0
  %579 = vmatpush1.bf16.msra.mxu0 %v568
  %580 = vmatprep.subr.bf16.mxu0 0
  %581 = vmatpush1.bf16.msra.mxu0 %v569
  %582 = vmatprep.subr.bf16.mxu0 0
  %583 = vmatpush1.bf16.msra.mxu0 0
  %584 = vmatprep.subr.bf16.mxu0 0
  %585 = vmatpush1.bf16.msra.mxu0 0
  %586 = vmatprep.subr.bf16.mxu0 0
  %587 = vmatpush1.bf16.msra.mxu0 0
  %588 = vmatprep.subr.bf16.mxu0 0
  %589 = vmatpush1.bf16.msra.mxu0 0
  %590 = vmatprep.subr.bf16.mxu0 0
  %591 = vmatpush1.bf16.msra.mxu0 0
  %592 = vmatprep.subr.bf16.mxu0 0
  %593 = vmatpush1.bf16.msra.mxu0 0
  %594 = vmatprep.subr.bf16.mxu0 0
  %595 = vmatpush1.bf16.msra.mxu0 0
  %596 = vmatprep.subr.bf16.mxu0 0
  %597 = vmatpush1.bf16.msra.mxu0 0
  %598 = vmatprep.subr.bf16.mxu0 0
  %599 = vmatpush1.bf16.msra.mxu0 0
  %600 = vmatprep.subr.bf16.mxu0 0
  %601 = vmatpush1.bf16.msra.mxu0 0
  %602 = vmatprep.subr.bf16.mxu0 0
  %603 = vmatpush1.bf16.msra.mxu0 0
  %604 = vmatprep.subr.bf16.mxu0 0
  %605 = vmatpush1.bf16.msra.mxu0 0
  %606 = vmatprep.mubr.bf16.mxu0 0
  %607 = vmatmul.mubr.bf16.gmra.mrb[0].mxu0 %v129
  %v608 = vpop.f32.mrb[0].mxu0
  %v609 = vadd.f32 0.0, %v608
  %v610 = vpop.f32.mrb[0].mxu0
  %v611 = vpop.f32.mrb[0].mxu0
  %v612 = vadd.f32 0.0, %v611
  %v613 = vpop.f32.mrb[0].mxu0
  %614 = vmatprep.mubr.bf16.mxu0 0
  %615 = vmatmul.mubr.bf16.gmra.mrb[0].mxu0 %v132
  %v616 = vpop.f32.mrb[0].mxu0
  %v617 = vadd.f32 0.0, %v616
  %v618 = vpop.f32.mrb[0].mxu0
  %v619 = vpop.f32.mrb[0].mxu0
  %v620 = vadd.f32 0.0, %v619
  %v621 = vpop.f32.mrb[0].mxu0
  %622 = vmatprep.mubr.bf16.mxu0 0
  %623 = vmatmul.mubr.bf16.gmra.mrb[0].mxu0 %v135
  %v624 = vpop.f32.mrb[0].mxu0
  %v625 = vadd.f32 0.0, %v624
  %v626 = vpop.f32.mrb[0].mxu0
  %v627 = vpop.f32.mrb[0].mxu0
  %v628 = vadd.f32 0.0, %v627
  %v629 = vpop.f32.mrb[0].mxu0
  %630 = vmatprep.mubr.bf16.mxu0 0
  %631 = vmatmul.mubr.bf16.gmra.mrb[0].mxu0 %v138
  %v632 = vpop.f32.mrb[0].mxu0
  %v633 = vadd.f32 0.0, %v632
  %v634 = vpop.f32.mrb[0].mxu0
  %v635 = vpop.f32.mrb[0].mxu0
  %v636 = vadd.f32 0.0, %v635
  %v637 = vpop.f32.mrb[0].mxu0
  %638 = vmatprep.mubr.bf16.mxu0 0
  %639 = vmatmul.mubr.bf16.gmra.mrb[0].mxu0 %v141
  %v640 = vpop.f32.mrb[0].mxu0
  %v641 = vadd.f32 0.0, %v640
  %v642 = vpop.f32.mrb[0].mxu0
  %v643 = vpop.f32.mrb[0].mxu0
  %v644 = vadd.f32 0.0, %v643
  %v645 = vpop.f32.mrb[0].mxu0
  %646 = vmatprep.mubr.bf16.mxu0 0
  %647 = vmatmul.mubr.bf16.gmra.mrb[0].mxu0 %v144
  %v648 = vpop.f32.mrb[0].mxu0
  %v649 = vadd.f32 0.0, %v648
  %v650 = vpop.f32.mrb[0].mxu0
  %v651 = vpop.f32.mrb[0].mxu0
  %v652 = vadd.f32 0.0, %v651
  %v653 = vpop.f32.mrb[0].mxu0
  %654 = vmatprep.mubr.bf16.mxu0 0
  %655 = vmatmul.mubr.bf16.gmra.mrb[0].mxu0 %v147
  %v656 = vpop.f32.mrb[0].mxu0
  %v657 = vadd.f32 0.0, %v656
  %v658 = vpop.f32.mrb[0].mxu0
  %v659 = vpop.f32.mrb[0].mxu0
  %v660 = vadd.f32 0.0, %v659
  %v661 = vpop.f32.mrb[0].mxu0
  %662 = vmatprep.mubr.bf16.mxu0 0
  %663 = vmatmul.mubr.bf16.gmra.mrb[0].mxu0 %v150
  %v664 = vpop.f32.mrb[0].mxu0
  %v665 = vadd.f32 0.0, %v664
  %v666 = vpop.f32.mrb[0].mxu0
  %v667 = vpop.f32.mrb[0].mxu0
  %v668 = vadd.f32 0.0, %v667
  %v669 = vpop.f32.mrb[0].mxu0
  %670 = vdwg.mxu0
  %v671 = vmax.f32 %v525, %v609
  %v672 = vmax.f32 %v526, %v612
  %v673 = vmax.f32 %v527, %v617
  %v674 = vmax.f32 %v528, %v620
  %v675 = vmax.f32 %v529, %v625
  %v676 = vmax.f32 %v530, %v628
  %v677 = vmax.f32 %v531, %v633
  %v678 = vmax.f32 %v532, %v636
  %v679 = vmax.f32 %v533, %v641
  %v680 = vmax.f32 %v534, %v644
  %v681 = vmax.f32 %v535, %v649
  %v682 = vmax.f32 %v536, %v652
  %v683 = vmax.f32 %v537, %v657
  %v684 = vmax.f32 %v538, %v660
  %v685 = vmax.f32 %v539, %v665
  %v686 = vmax.f32 %v540, %v668
  %v687 = vld [vmem:[%s2] sm:$0x1]
  %v689 = vlaneseq
  %v690 = vshrl.u32 %v689, 7
  %v691 = vsub.s32 0, %v690
  %v692 = vrot.slane %v687, %v691
  %v694 = vadd.f32 %v671, %v692
  %v695 = vadd.f32 %v672, %v692
  %v696 = vadd.f32 %v673, %v692
  %v697 = vadd.f32 %v674, %v692
  %v698 = vadd.f32 %v675, %v692
  %v699 = vadd.f32 %v676, %v692
  %v700 = vadd.f32 %v677, %v692
  %v701 = vadd.f32 %v678, %v692
  %v702 = vadd.f32 %v679, %v692
  %v703 = vadd.f32 %v680, %v692
  %v704 = vadd.f32 %v681, %v692
  %v705 = vadd.f32 %v682, %v692
  %v706 = vadd.f32 %v683, %v692
  %v707 = vadd.f32 %v684, %v692
  %v708 = vadd.f32 %v685, %v692
  %v709 = vadd.f32 %v686, %v692
  %v710 = vmax.f32 %v694, 0.0
  %v711 = vmax.f32 %v695, 0.0
  %v712 = vmax.f32 %v696, 0.0
  %v713 = vmax.f32 %v697, 0.0
  %v714 = vmax.f32 %v698, 0.0
  %v715 = vmax.f32 %v699, 0.0
  %v716 = vmax.f32 %v700, 0.0
  %v717 = vmax.f32 %v701, 0.0
  %v718 = vmax.f32 %v702, 0.0
  %v719 = vmax.f32 %v703, 0.0
  %v720 = vmax.f32 %v704, 0.0
  %v721 = vmax.f32 %v705, 0.0
  %v722 = vmax.f32 %v706, 0.0
  %v723 = vmax.f32 %v707, 0.0
  %v724 = vmax.f32 %v708, 0.0
  %v725 = vmax.f32 %v709, 0.0
  %v726 = vpack.c.bf16 %v711, %v710
  %v727 = vpack.c.bf16 %v713, %v712
  %v728 = vpack.c.bf16 %v715, %v714
  %v729 = vpack.c.bf16 %v717, %v716
  %v730 = vpack.c.bf16 %v719, %v718
  %v731 = vpack.c.bf16 %v721, %v720
  %v732 = vpack.c.bf16 %v723, %v722
  %v733 = vpack.c.bf16 %v725, %v724
  %v734 = vld [vmem:[%s3] sm:$0xf]
  %v735 = vld [vmem:[%s3 + $0x4] sm:$0xf]
  %v736 = vld [vmem:[%s3 + $0x8] sm:$0xf]
  %v737 = vld [vmem:[%s3 + $0xc] sm:$0xf]
  %v738 = vld [vmem:[%s3 + $0x10] sm:$0xf]
  %v739 = vld [vmem:[%s3 + $0x14] sm:$0xf]
  %v740 = vld [vmem:[%s3 + $0x18] sm:$0xf]
  %v741 = vld [vmem:[%s3 + $0x1c] sm:$0xf]
  %v742 = vld [vmem:[%s3 + $0x20] sm:$0xf]
  %v743 = vld [vmem:[%s3 + $0x24] sm:$0xf]
  %v744 = vld [vmem:[%s3 + $0x28] sm:$0xf]
  %v745 = vld [vmem:[%s3 + $0x2c] sm:$0xf]
  %v746 = vld [vmem:[%s3 + $0x30] sm:$0xf]
  %v747 = vld [vmem:[%s3 + $0x34] sm:$0xf]
  %v748 = vld [vmem:[%s3 + $0x38] sm:$0xf]
  %v749 = vld [vmem:[%s3 + $0x3c] sm:$0xf]
  %v766 = vunpack.c.l.b16 %v734
  %v767 = vunpack.c.l.b16 %v735
  %v768 = vunpack.c.l.b16 %v736
  %v769 = vunpack.c.l.b16 %v737
  %v770 = vunpack.c.l.b16 %v738
  %v771 = vunpack.c.l.b16 %v739
  %v772 = vunpack.c.l.b16 %v740
  %v773 = vunpack.c.l.b16 %v741
  %v774 = vunpack.c.l.b16 %v742
  %v775 = vunpack.c.l.b16 %v743
  %v776 = vunpack.c.l.b16 %v744
  %v777 = vunpack.c.l.b16 %v745
  %v778 = vunpack.c.l.b16 %v746
  %v779 = vunpack.c.l.b16 %v747
  %v780 = vunpack.c.l.b16 %v748
  %v781 = vunpack.c.l.b16 %v749
  %v782 = vpack.c.b16 %v767, %v766
  %v783 = vpack.c.b16 %v769, %v768
  %v784 = vpack.c.b16 %v771, %v770
  %v785 = vpack.c.b16 %v773, %v772
  %v786 = vpack.c.b16 %v775, %v774
  %v787 = vpack.c.b16 %v777, %v776
  %v788 = vpack.c.b16 %v779, %v778
  %v789 = vpack.c.b16 %v781, %v780
  %798 = vmatprep.subr.bf16.mxu0 0
  %799 = vmatpush1.bf16.msra.mxu0 %v782
  %800 = vmatprep.subr.bf16.mxu0 0
  %801 = vmatpush1.bf16.msra.mxu0 %v783
  %802 = vmatprep.subr.bf16.mxu0 0
  %803 = vmatpush1.bf16.msra.mxu0 %v784
  %804 = vmatprep.subr.bf16.mxu0 0
  %805 = vmatpush1.bf16.msra.mxu0 %v785
  %806 = vmatprep.subr.bf16.mxu0 0
  %807 = vmatpush1.bf16.msra.mxu0 %v786
  %808 = vmatprep.subr.bf16.mxu0 0
  %809 = vmatpush1.bf16.msra.mxu0 %v787
  %810 = vmatprep.subr.bf16.mxu0 0
  %811 = vmatpush1.bf16.msra.mxu0 %v788
  %812 = vmatprep.subr.bf16.mxu0 0
  %813 = vmatpush1.bf16.msra.mxu0 %v789
  %814 = vmatprep.subr.bf16.mxu0 0
  %815 = vmatpush1.bf16.msra.mxu0 0
  %816 = vmatprep.subr.bf16.mxu0 0
  %817 = vmatpush1.bf16.msra.mxu0 0
  %818 = vmatprep.subr.bf16.mxu0 0
  %819 = vmatpush1.bf16.msra.mxu0 0
  %820 = vmatprep.subr.bf16.mxu0 0
  %821 = vmatpush1.bf16.msra.mxu0 0
  %822 = vmatprep.subr.bf16.mxu0 0
  %823 = vmatpush1.bf16.msra.mxu0 0
  %824 = vmatprep.subr.bf16.mxu0 0
  %825 = vmatpush1.bf16.msra.mxu0 0
  %826 = vmatprep.subr.bf16.mxu0 0
  %827 = vmatpush1.bf16.msra.mxu0 0
  %828 = vmatprep.subr.bf16.mxu0 0
  %829 = vmatpush1.bf16.msra.mxu0 0
  %830 = vmatprep.mubr.bf16.mxu0 0
  %831 = vmatmul.mubr.bf16.gmra.mrb[0].mxu0 %v726
  %v832 = vpop.f32.mrb[0].mxu0
  %v833 = vadd.f32 0.0, %v832
  %v834 = vpop.f32.mrb[0].mxu0
  %v835 = vpop.f32.mrb[0].mxu0
  %v836 = vadd.f32 0.0, %v835
  %v837 = vpop.f32.mrb[0].mxu0
  %838 = vmatprep.mubr.bf16.mxu0 0
  %839 = vmatmul.mubr.bf16.gmra.mrb[0].mxu0 %v727
  %v840 = vpop.f32.mrb[0].mxu0
  %v841 = vadd.f32 0.0, %v840
  %v842 = vpop.f32.mrb[0].mxu0
  %v843 = vpop.f32.mrb[0].mxu0
  %v844 = vadd.f32 0.0, %v843
  %v845 = vpop.f32.mrb[0].mxu0
  %846 = vmatprep.mubr.bf16.mxu0 0
  %847 = vmatmul.mubr.bf16.gmra.mrb[0].mxu0 %v728
  %v848 = vpop.f32.mrb[0].mxu0
  %v849 = vadd.f32 0.0, %v848
  %v850 = vpop.f32.mrb[0].mxu0
  %v851 = vpop.f32.mrb[0].mxu0
  %v852 = vadd.f32 0.0, %v851
  %v853 = vpop.f32.mrb[0].mxu0
  %854 = vmatprep.mubr.bf16.mxu0 0
  %855 = vmatmul.mubr.bf16.gmra.mrb[0].mxu0 %v729
  %v856 = vpop.f32.mrb[0].mxu0
  %v857 = vadd.f32 0.0, %v856
  %v858 = vpop.f32.mrb[0].mxu0
  %v859 = vpop.f32.mrb[0].mxu0
  %v860 = vadd.f32 0.0, %v859
  %v861 = vpop.f32.mrb[0].mxu0
  %862 = vmatprep.mubr.bf16.mxu0 0
  %863 = vmatmul.mubr.bf16.gmra.mrb[0].mxu0 %v730
  %v864 = vpop.f32.mrb[0].mxu0
  %v865 = vadd.f32 0.0, %v864
  %v866 = vpop.f32.mrb[0].mxu0
  %v867 = vpop.f32.mrb[0].mxu0
  %v868 = vadd.f32 0.0, %v867
  %v869 = vpop.f32.mrb[0].mxu0
  %870 = vmatprep.mubr.bf16.mxu0 0
  %871 = vmatmul.mubr.bf16.gmra.mrb[0].mxu0 %v731
  %v872 = vpop.f32.mrb[0].mxu0
  %v873 = vadd.f32 0.0, %v872
  %v874 = vpop.f32.mrb[0].mxu0
  %v875 = vpop.f32.mrb[0].mxu0
  %v876 = vadd.f32 0.0, %v875
  %v877 = vpop.f32.mrb[0].mxu0
  %878 = vmatprep.mubr.bf16.mxu0 0
  %879 = vmatmul.mubr.bf16.gmra.mrb[0].mxu0 %v732
  %v880 = vpop.f32.mrb[0].mxu0
  %v881 = vadd.f32 0.0, %v880
  %v882 = vpop.f32.mrb[0].mxu0
  %v883 = vpop.f32.mrb[0].mxu0
  %v884 = vadd.f32 0.0, %v883
  %v885 = vpop.f32.mrb[0].mxu0
  %886 = vmatprep.mubr.bf16.mxu0 0
  %887 = vmatmul.mubr.bf16.gmra.mrb[0].mxu0 %v733
  %v888 = vpop.f32.mrb[0].mxu0
  %v889 = vadd.f32 0.0, %v888
  %v890 = vpop.f32.mrb[0].mxu0
  %v891 = vpop.f32.mrb[0].mxu0
  %v892 = vadd.f32 0.0, %v891
  %v893 = vpop.f32.mrb[0].mxu0
  %894 = vdwg.mxu0
  %v895 = vmax.f32 %v833, %v849
  %v896 = vmax.f32 %v836, %v852
  %v897 = vmax.f32 %v841, %v857
  %v898 = vmax.f32 %v844, %v860
  %v899 = vmax.f32 %v865, %v881
  %v900 = vmax.f32 %v868, %v884
  %v901 = vmax.f32 %v873, %v889
  %v902 = vmax.f32 %v876, %v892
  %v903 = vmax.f32 %v895, %v899
  %v904 = vmax.f32 %v896, %v900
  %v905 = vmax.f32 %v897, %v901
  %v906 = vmax.f32 %v898, %v902
  %v907 = vld [vmem:[%s4] sm:$0x1]
  %v909 = vlaneseq
  %v910 = vshrl.u32 %v909, 7
  %v911 = vsub.s32 0, %v910
  %v912 = vrot.slane %v907, %v911
  %v914 = vadd.f32 %v903, %v912
  %v915 = vadd.f32 %v904, %v912
  %v916 = vadd.f32 %v905, %v912
  %v917 = vadd.f32 %v906, %v912
  %v918 = vmax.f32 %v914, 0.0
  %v919 = vmax.f32 %v915, 0.0
  %v920 = vmax.f32 %v916, 0.0
  %v921 = vmax.f32 %v917, 0.0
  %v922 = vpack.c.bf16 %v919, %v918
  %v923 = vpack.c.bf16 %v921, %v920
  %v924 = vld [vmem:[%s5] sm:$0xf]
  %v925 = vld [vmem:[%s5 + $0x4] sm:$0xf]
  %v926 = vld [vmem:[%s5 + $0x8] sm:$0xf]
  %v927 = vld [vmem:[%s5 + $0xc] sm:$0xf]
  %v928 = vld [vmem:[%s5 + $0x10] sm:$0xf]
  %v929 = vld [vmem:[%s5 + $0x14] sm:$0xf]
  %v930 = vld [vmem:[%s5 + $0x18] sm:$0xf]
  %v931 = vld [vmem:[%s5 + $0x1c] sm:$0xf]
  %v932 = vld [vmem:[%s5 + $0x20] sm:$0xf]
  %v933 = vld [vmem:[%s5 + $0x24] sm:$0xf]
  %v934 = vld [vmem:[%s5 + $0x28] sm:$0xf]
  %v935 = vld [vmem:[%s5 + $0x2c] sm:$0xf]
  %v936 = vld [vmem:[%s5 + $0x30] sm:$0xf]
  %v937 = vld [vmem:[%s5 + $0x34] sm:$0xf]
  %v938 = vld [vmem:[%s5 + $0x38] sm:$0xf]
  %v939 = vld [vmem:[%s5 + $0x3c] sm:$0xf]
  %s940 = scalar_lea.vmem %s5, 64
  %v941 = vld [vmem:[%s940] sm:$0xf]
  %v942 = vld [vmem:[%s940 + $0x4] sm:$0xf]
  %v943 = vld [vmem:[%s940 + $0x8] sm:$0xf]
  %v944 = vld [vmem:[%s940 + $0xc] sm:$0xf]
  %v945 = vld [vmem:[%s940 + $0x10] sm:$0xf]
  %v946 = vld [vmem:[%s940 + $0x14] sm:$0xf]
  %v947 = vld [vmem:[%s940 + $0x18] sm:$0xf]
  %v948 = vld [vmem:[%s940 + $0x1c] sm:$0xf]
  %v949 = vld [vmem:[%s940 + $0x20] sm:$0xf]
  %v950 = vld [vmem:[%s940 + $0x24] sm:$0xf]
  %v951 = vld [vmem:[%s940 + $0x28] sm:$0xf]
  %v952 = vld [vmem:[%s940 + $0x2c] sm:$0xf]
  %v953 = vld [vmem:[%s940 + $0x30] sm:$0xf]
  %v954 = vld [vmem:[%s940 + $0x34] sm:$0xf]
  %v955 = vld [vmem:[%s940 + $0x38] sm:$0xf]
  %v956 = vld [vmem:[%s940 + $0x3c] sm:$0xf]
  %v958 = vrot.slane %v922, 4
  %v976 = vunpack.c.l.b16 %v941
  %v977 = vunpack.c.l.b16 %v942
  %v978 = vunpack.c.l.b16 %v943
  %v979 = vunpack.c.l.b16 %v944
  %v980 = vunpack.c.l.b16 %v945
  %v981 = vunpack.c.l.b16 %v946
  %v982 = vunpack.c.l.b16 %v947
  %v983 = vunpack.c.l.b16 %v948
  %v984 = vunpack.c.l.b16 %v949
  %v985 = vunpack.c.l.b16 %v950
  %v986 = vunpack.c.l.b16 %v951
  %v987 = vunpack.c.l.b16 %v952
  %v988 = vunpack.c.l.b16 %v953
  %v989 = vunpack.c.l.b16 %v954
  %v990 = vunpack.c.l.b16 %v955
  %v991 = vunpack.c.l.b16 %v956
  %v992 = vpack.c.b16 %v977, %v976
  %v993 = vpack.c.b16 %v979, %v978
  %v994 = vpack.c.b16 %v981, %v980
  %v995 = vpack.c.b16 %v983, %v982
  %v996 = vpack.c.b16 %v985, %v984
  %v997 = vpack.c.b16 %v987, %v986
  %v998 = vpack.c.b16 %v989, %v988
  %v999 = vpack.c.b16 %v991, %v990
  %1008 = vmatprep.subr.bf16.mxu0 0
  %1009 = vmatpush1.bf16.msra.mxu0 %v992
  %1010 = vmatprep.subr.bf16.mxu0 0
  %1011 = vmatpush1.bf16.msra.mxu0 %v993
  %1012 = vmatprep.subr.bf16.mxu0 0
  %1013 = vmatpush1.bf16.msra.mxu0 %v994
  %1014 = vmatprep.subr.bf16.mxu0 0
  %1015 = vmatpush1.bf16.msra.mxu0 %v995
  %1016 = vmatprep.subr.bf16.mxu0 0
  %1017 = vmatpush1.bf16.msra.mxu0 %v996
  %1018 = vmatprep.subr.bf16.mxu0 0
  %1019 = vmatpush1.bf16.msra.mxu0 %v997
  %1020 = vmatprep.subr.bf16.mxu0 0
  %1021 = vmatpush1.bf16.msra.mxu0 %v998
  %1022 = vmatprep.subr.bf16.mxu0 0
  %1023 = vmatpush1.bf16.msra.mxu0 %v999
  %1024 = vmatprep.subr.bf16.mxu0 0
  %1025 = vmatpush1.bf16.msra.mxu0 0
  %1026 = vmatprep.subr.bf16.mxu0 0
  %1027 = vmatpush1.bf16.msra.mxu0 0
  %1028 = vmatprep.subr.bf16.mxu0 0
  %1029 = vmatpush1.bf16.msra.mxu0 0
  %1030 = vmatprep.subr.bf16.mxu0 0
  %1031 = vmatpush1.bf16.msra.mxu0 0
  %1032 = vmatprep.subr.bf16.mxu0 0
  %1033 = vmatpush1.bf16.msra.mxu0 0
  %1034 = vmatprep.subr.bf16.mxu0 0
  %1035 = vmatpush1.bf16.msra.mxu0 0
  %1036 = vmatprep.subr.bf16.mxu0 0
  %1037 = vmatpush1.bf16.msra.mxu0 0
  %1038 = vmatprep.subr.bf16.mxu0 0
  %1039 = vmatpush1.bf16.msra.mxu0 0
  %1040 = vmatprep.mubr.bf16.mxu0 0
  %1041 = vmatmul.mubr.bf16.gmra.mrb[0].mxu0 %v958
  %v1042 = vpop.f32.mrb[0].mxu0
  %v1043 = vadd.f32 0.0, %v1042
  %v1044 = vpop.f32.mrb[0].mxu0
  %v1045 = vpop.f32.mrb[0].mxu0
  %v1046 = vpop.f32.mrb[0].mxu0
  %1047 = vdwg.mxu0
  %v1064 = vunpack.c.l.b16 %v924
  %v1065 = vunpack.c.l.b16 %v925
  %v1066 = vunpack.c.l.b16 %v926
  %v1067 = vunpack.c.l.b16 %v927
  %v1068 = vunpack.c.l.b16 %v928
  %v1069 = vunpack.c.l.b16 %v929
  %v1070 = vunpack.c.l.b16 %v930
  %v1071 = vunpack.c.l.b16 %v931
  %v1072 = vunpack.c.l.b16 %v932
  %v1073 = vunpack.c.l.b16 %v933
  %v1074 = vunpack.c.l.b16 %v934
  %v1075 = vunpack.c.l.b16 %v935
  %v1076 = vunpack.c.l.b16 %v936
  %v1077 = vunpack.c.l.b16 %v937
  %v1078 = vunpack.c.l.b16 %v938
  %v1079 = vunpack.c.l.b16 %v939
  %v1080 = vpack.c.b16 %v1065, %v1064
  %v1081 = vpack.c.b16 %v1067, %v1066
  %v1082 = vpack.c.b16 %v1069, %v1068
  %v1083 = vpack.c.b16 %v1071, %v1070
  %v1084 = vpack.c.b16 %v1073, %v1072
  %v1085 = vpack.c.b16 %v1075, %v1074
  %v1086 = vpack.c.b16 %v1077, %v1076
  %v1087 = vpack.c.b16 %v1079, %v1078
  %1096 = vmatprep.subr.bf16.mxu0 0
  %1097 = vmatpush1.bf16.msra.mxu0 %v1080
  %1098 = vmatprep.subr.bf16.mxu0 0
  %1099 = vmatpush1.bf16.msra.mxu0 %v1081
  %1100 = vmatprep.subr.bf16.mxu0 0
  %1101 = vmatpush1.bf16.msra.mxu0 %v1082
  %1102 = vmatprep.subr.bf16.mxu0 0
  %1103 = vmatpush1.bf16.msra.mxu0 %v1083
  %1104 = vmatprep.subr.bf16.mxu0 0
  %1105 = vmatpush1.bf16.msra.mxu0 %v1084
  %1106 = vmatprep.subr.bf16.mxu0 0
  %1107 = vmatpush1.bf16.msra.mxu0 %v1085
  %1108 = vmatprep.subr.bf16.mxu0 0
  %1109 = vmatpush1.bf16.msra.mxu0 %v1086
  %1110 = vmatprep.subr.bf16.mxu0 0
  %1111 = vmatpush1.bf16.msra.mxu0 %v1087
  %1112 = vmatprep.subr.bf16.mxu0 0
  %1113 = vmatpush1.bf16.msra.mxu0 0
  %1114 = vmatprep.subr.bf16.mxu0 0
  %1115 = vmatpush1.bf16.msra.mxu0 0
  %1116 = vmatprep.subr.bf16.mxu0 0
  %1117 = vmatpush1.bf16.msra.mxu0 0
  %1118 = vmatprep.subr.bf16.mxu0 0
  %1119 = vmatpush1.bf16.msra.mxu0 0
  %1120 = vmatprep.subr.bf16.mxu0 0
  %1121 = vmatpush1.bf16.msra.mxu0 0
  %1122 = vmatprep.subr.bf16.mxu0 0
  %1123 = vmatpush1.bf16.msra.mxu0 0
  %1124 = vmatprep.subr.bf16.mxu0 0
  %1125 = vmatpush1.bf16.msra.mxu0 0
  %1126 = vmatprep.subr.bf16.mxu0 0
  %1127 = vmatpush1.bf16.msra.mxu0 0
  %1128 = vmatprep.mubr.bf16.mxu0 0
  %1129 = vmatmul.mubr.bf16.gmra.mrb[0].mxu0 %v922
  %v1130 = vpop.f32.mrb[0].mxu0
  %v1131 = vadd.f32 %v1043, %v1130
  %v1132 = vpop.f32.mrb[0].mxu0
  %v1133 = vpop.f32.mrb[0].mxu0
  %v1134 = vpop.f32.mrb[0].mxu0
  %1135 = vdwg.mxu0
  %s1136 = scalar_lea.vmem %s5, 128
  %v1137 = vld [vmem:[%s1136] sm:$0xf]
  %v1138 = vld [vmem:[%s1136 + $0x4] sm:$0xf]
  %v1139 = vld [vmem:[%s1136 + $0x8] sm:$0xf]
  %v1140 = vld [vmem:[%s1136 + $0xc] sm:$0xf]
  %v1141 = vld [vmem:[%s1136 + $0x10] sm:$0xf]
  %v1142 = vld [vmem:[%s1136 + $0x14] sm:$0xf]
  %v1143 = vld [vmem:[%s1136 + $0x18] sm:$0xf]
  %v1144 = vld [vmem:[%s1136 + $0x1c] sm:$0xf]
  %v1145 = vld [vmem:[%s1136 + $0x20] sm:$0xf]
  %v1146 = vld [vmem:[%s1136 + $0x24] sm:$0xf]
  %v1147 = vld [vmem:[%s1136 + $0x28] sm:$0xf]
  %v1148 = vld [vmem:[%s1136 + $0x2c] sm:$0xf]
  %v1149 = vld [vmem:[%s1136 + $0x30] sm:$0xf]
  %v1150 = vld [vmem:[%s1136 + $0x34] sm:$0xf]
  %v1151 = vld [vmem:[%s1136 + $0x38] sm:$0xf]
  %v1152 = vld [vmem:[%s1136 + $0x3c] sm:$0xf]
  %v1169 = vunpack.c.l.b16 %v1137
  %v1170 = vunpack.c.l.b16 %v1138
  %v1171 = vunpack.c.l.b16 %v1139
  %v1172 = vunpack.c.l.b16 %v1140
  %v1173 = vunpack.c.l.b16 %v1141
  %v1174 = vunpack.c.l.b16 %v1142
  %v1175 = vunpack.c.l.b16 %v1143
  %v1176 = vunpack.c.l.b16 %v1144
  %v1177 = vunpack.c.l.b16 %v1145
  %v1178 = vunpack.c.l.b16 %v1146
  %v1179 = vunpack.c.l.b16 %v1147
  %v1180 = vunpack.c.l.b16 %v1148
  %v1181 = vunpack.c.l.b16 %v1149
  %v1182 = vunpack.c.l.b16 %v1150
  %v1183 = vunpack.c.l.b16 %v1151
  %v1184 = vunpack.c.l.b16 %v1152
  %v1185 = vpack.c.b16 %v1170, %v1169
  %v1186 = vpack.c.b16 %v1172, %v1171
  %v1187 = vpack.c.b16 %v1174, %v1173
  %v1188 = vpack.c.b16 %v1176, %v1175
  %v1189 = vpack.c.b16 %v1178, %v1177
  %v1190 = vpack.c.b16 %v1180, %v1179
  %v1191 = vpack.c.b16 %v1182, %v1181
  %v1192 = vpack.c.b16 %v1184, %v1183
  %1201 = vmatprep.subr.bf16.mxu0 0
  %1202 = vmatpush1.bf16.msra.mxu0 %v1185
  %1203 = vmatprep.subr.bf16.mxu0 0
  %1204 = vmatpush1.bf16.msra.mxu0 %v1186
  %1205 = vmatprep.subr.bf16.mxu0 0
  %1206 = vmatpush1.bf16.msra.mxu0 %v1187
  %1207 = vmatprep.subr.bf16.mxu0 0
  %1208 = vmatpush1.bf16.msra.mxu0 %v1188
  %1209 = vmatprep.subr.bf16.mxu0 0
  %1210 = vmatpush1.bf16.msra.mxu0 %v1189
  %1211 = vmatprep.subr.bf16.mxu0 0
  %1212 = vmatpush1.bf16.msra.mxu0 %v1190
  %1213 = vmatprep.subr.bf16.mxu0 0
  %1214 = vmatpush1.bf16.msra.mxu0 %v1191
  %1215 = vmatprep.subr.bf16.mxu0 0
  %1216 = vmatpush1.bf16.msra.mxu0 %v1192
  %1217 = vmatprep.subr.bf16.mxu0 0
  %1218 = vmatpush1.bf16.msra.mxu0 0
  %1219 = vmatprep.subr.bf16.mxu0 0
  %1220 = vmatpush1.bf16.msra.mxu0 0
  %1221 = vmatprep.subr.bf16.mxu0 0
  %1222 = vmatpush1.bf16.msra.mxu0 0
  %1223 = vmatprep.subr.bf16.mxu0 0
  %1224 = vmatpush1.bf16.msra.mxu0 0
  %1225 = vmatprep.subr.bf16.mxu0 0
  %1226 = vmatpush1.bf16.msra.mxu0 0
  %1227 = vmatprep.subr.bf16.mxu0 0
  %1228 = vmatpush1.bf16.msra.mxu0 0
  %1229 = vmatprep.subr.bf16.mxu0 0
  %1230 = vmatpush1.bf16.msra.mxu0 0
  %1231 = vmatprep.subr.bf16.mxu0 0
  %1232 = vmatpush1.bf16.msra.mxu0 0
  %1233 = vmatprep.mubr.bf16.mxu0 0
  %1234 = vmatmul.mubr.bf16.gmra.mrb[0].mxu0 %v923
  %v1235 = vpop.f32.mrb[0].mxu0
  %v1236 = vadd.f32 0.0, %v1235
  %v1237 = vpop.f32.mrb[0].mxu0
  %v1238 = vpop.f32.mrb[0].mxu0
  %v1239 = vpop.f32.mrb[0].mxu0
  %1240 = vdwg.mxu0
  %v1241 = vadd.f32 %v1131, %v1236
  %s1242 = scalar_lea.vmem %s5, 192
  %v1243 = vld [vmem:[%s1242] sm:$0xf]
  %v1244 = vld [vmem:[%s1242 + $0x4] sm:$0xf]
  %v1245 = vld [vmem:[%s1242 + $0x8] sm:$0xf]
  %v1246 = vld [vmem:[%s1242 + $0xc] sm:$0xf]
  %v1247 = vld [vmem:[%s1242 + $0x10] sm:$0xf]
  %v1248 = vld [vmem:[%s1242 + $0x14] sm:$0xf]
  %v1249 = vld [vmem:[%s1242 + $0x18] sm:$0xf]
  %v1250 = vld [vmem:[%s1242 + $0x1c] sm:$0xf]
  %v1251 = vld [vmem:[%s1242 + $0x20] sm:$0xf]
  %v1252 = vld [vmem:[%s1242 + $0x24] sm:$0xf]
  %v1253 = vld [vmem:[%s1242 + $0x28] sm:$0xf]
  %v1254 = vld [vmem:[%s1242 + $0x2c] sm:$0xf]
  %v1255 = vld [vmem:[%s1242 + $0x30] sm:$0xf]
  %v1256 = vld [vmem:[%s1242 + $0x34] sm:$0xf]
  %v1257 = vld [vmem:[%s1242 + $0x38] sm:$0xf]
  %v1258 = vld [vmem:[%s1242 + $0x3c] sm:$0xf]
  %v1260 = vrot.slane %v923, 4
  %v1278 = vunpack.c.l.b16 %v1243
  %v1279 = vunpack.c.l.b16 %v1244
  %v1280 = vunpack.c.l.b16 %v1245
  %v1281 = vunpack.c.l.b16 %v1246
  %v1282 = vunpack.c.l.b16 %v1247
  %v1283 = vunpack.c.l.b16 %v1248
  %v1284 = vunpack.c.l.b16 %v1249
  %v1285 = vunpack.c.l.b16 %v1250
  %v1286 = vunpack.c.l.b16 %v1251
  %v1287 = vunpack.c.l.b16 %v1252
  %v1288 = vunpack.c.l.b16 %v1253
  %v1289 = vunpack.c.l.b16 %v1254
  %v1290 = vunpack.c.l.b16 %v1255
  %v1291 = vunpack.c.l.b16 %v1256
  %v1292 = vunpack.c.l.b16 %v1257
  %v1293 = vunpack.c.l.b16 %v1258
  %v1294 = vpack.c.b16 %v1279, %v1278
  %v1295 = vpack.c.b16 %v1281, %v1280
  %v1296 = vpack.c.b16 %v1283, %v1282
  %v1297 = vpack.c.b16 %v1285, %v1284
  %v1298 = vpack.c.b16 %v1287, %v1286
  %v1299 = vpack.c.b16 %v1289, %v1288
  %v1300 = vpack.c.b16 %v1291, %v1290
  %v1301 = vpack.c.b16 %v1293, %v1292
  %1310 = vmatprep.subr.bf16.mxu0 0
  %1311 = vmatpush1.bf16.msra.mxu0 %v1294
  %1312 = vmatprep.subr.bf16.mxu0 0
  %1313 = vmatpush1.bf16.msra.mxu0 %v1295
  %1314 = vmatprep.subr.bf16.mxu0 0
  %1315 = vmatpush1.bf16.msra.mxu0 %v1296
  %1316 = vmatprep.subr.bf16.mxu0 0
  %1317 = vmatpush1.bf16.msra.mxu0 %v1297
  %1318 = vmatprep.subr.bf16.mxu0 0
  %1319 = vmatpush1.bf16.msra.mxu0 %v1298
  %1320 = vmatprep.subr.bf16.mxu0 0
  %1321 = vmatpush1.bf16.msra.mxu0 %v1299
  %1322 = vmatprep.subr.bf16.mxu0 0
  %1323 = vmatpush1.bf16.msra.mxu0 %v1300
  %1324 = vmatprep.subr.bf16.mxu0 0
  %1325 = vmatpush1.bf16.msra.mxu0 %v1301
  %1326 = vmatprep.subr.bf16.mxu0 0
  %1327 = vmatpush1.bf16.msra.mxu0 0
  %1328 = vmatprep.subr.bf16.mxu0 0
  %1329 = vmatpush1.bf16.msra.mxu0 0
  %1330 = vmatprep.subr.bf16.mxu0 0
  %1331 = vmatpush1.bf16.msra.mxu0 0
  %1332 = vmatprep.subr.bf16.mxu0 0
  %1333 = vmatpush1.bf16.msra.mxu0 0
  %1334 = vmatprep.subr.bf16.mxu0 0
  %1335 = vmatpush1.bf16.msra.mxu0 0
  %1336 = vmatprep.subr.bf16.mxu0 0
  %1337 = vmatpush1.bf16.msra.mxu0 0
  %1338 = vmatprep.subr.bf16.mxu0 0
  %1339 = vmatpush1.bf16.msra.mxu0 0
  %1340 = vmatprep.subr.bf16.mxu0 0
  %1341 = vmatpush1.bf16.msra.mxu0 0
  %1342 = vmatprep.mubr.bf16.mxu0 0
  %1343 = vmatmul.mubr.bf16.gmra.mrb[0].mxu0 %v1260
  %v1344 = vpop.f32.mrb[0].mxu0
  %v1345 = vadd.f32 0.0, %v1344
  %v1346 = vpop.f32.mrb[0].mxu0
  %v1347 = vpop.f32.mrb[0].mxu0
  %v1348 = vpop.f32.mrb[0].mxu0
  %1349 = vdwg.mxu0
  %v1350 = vadd.f32 %v1241, %v1345
  %v1351 = vld [vmem:[%s6] sm:$0x1]
  %v1353 = vlaneseq
  %v1354 = vshrl.u32 %v1353, 7
  %v1355 = vsub.s32 0, %v1354
  %v1356 = vrot.slane %v1351, %v1355
  %v1358 = vadd.f32 %v1350, %v1356
  %v1359 = vmax.f32 %v1358, 0.0
  %v1360 = vpack.c.bf16 %v1359, %v1359
  %v1361 = vld [vmem:[%s7] sm:$0xf]
  %v1362 = vld [vmem:[%s7 + $0x4] sm:$0xf]
  %v1363 = vld [vmem:[%s7 + $0x8] sm:$0xf]
  %v1364 = vld [vmem:[%s7 + $0xc] sm:$0xf]
  %v1365 = vld [vmem:[%s7 + $0x10] sm:$0xf]
  %v1366 = vld [vmem:[%s7 + $0x14] sm:$0xf]
  %v1367 = vld [vmem:[%s7 + $0x18] sm:$0xf]
  %v1368 = vld [vmem:[%s7 + $0x1c] sm:$0xf]
  %v1369 = vld [vmem:[%s7 + $0x20] sm:$0xf]
  %v1370 = vld [vmem:[%s7 + $0x24] sm:$0xf]
  %v1371 = vld [vmem:[%s7 + $0x28] sm:$0xf]
  %v1372 = vld [vmem:[%s7 + $0x2c] sm:$0xf]
  %v1373 = vld [vmem:[%s7 + $0x30] sm:$0xf]
  %v1374 = vld [vmem:[%s7 + $0x34] sm:$0xf]
  %v1375 = vld [vmem:[%s7 + $0x38] sm:$0xf]
  %v1376 = vld [vmem:[%s7 + $0x3c] sm:$0xf]
  %v1377 = vld [vmem:[%s8] sm:$0x1]
  %v1379 = vlaneseq
  %v1380 = vshrl.u32 %v1379, 7
  %v1381 = vsub.s32 0, %v1380
  %v1382 = vrot.slane %v1377, %v1381
  %v1400 = vunpack.c.l.b16 %v1361
  %v1401 = vunpack.c.l.b16 %v1362
  %v1402 = vunpack.c.l.b16 %v1363
  %v1403 = vunpack.c.l.b16 %v1364
  %v1404 = vunpack.c.l.b16 %v1365
  %v1405 = vunpack.c.l.b16 %v1366
  %v1406 = vunpack.c.l.b16 %v1367
  %v1407 = vunpack.c.l.b16 %v1368
  %v1408 = vunpack.c.l.b16 %v1369
  %v1409 = vunpack.c.l.b16 %v1370
  %v1410 = vunpack.c.l.b16 %v1371
  %v1411 = vunpack.c.l.b16 %v1372
  %v1412 = vunpack.c.l.b16 %v1373
  %v1413 = vunpack.c.l.b16 %v1374
  %v1414 = vunpack.c.l.b16 %v1375
  %v1415 = vunpack.c.l.b16 %v1376
  %v1416 = vpack.c.b16 %v1401, %v1400
  %v1417 = vpack.c.b16 %v1403, %v1402
  %v1418 = vpack.c.b16 %v1405, %v1404
  %v1419 = vpack.c.b16 %v1407, %v1406
  %v1420 = vpack.c.b16 %v1409, %v1408
  %v1421 = vpack.c.b16 %v1411, %v1410
  %v1422 = vpack.c.b16 %v1413, %v1412
  %v1423 = vpack.c.b16 %v1415, %v1414
  %1432 = vmatprep.subr.bf16.mxu0 0
  %1433 = vmatpush1.bf16.msra.mxu0 %v1416
  %1434 = vmatprep.subr.bf16.mxu0 0
  %1435 = vmatpush1.bf16.msra.mxu0 %v1417
  %1436 = vmatprep.subr.bf16.mxu0 0
  %1437 = vmatpush1.bf16.msra.mxu0 %v1418
  %1438 = vmatprep.subr.bf16.mxu0 0
  %1439 = vmatpush1.bf16.msra.mxu0 %v1419
  %1440 = vmatprep.subr.bf16.mxu0 0
  %1441 = vmatpush1.bf16.msra.mxu0 %v1420
  %1442 = vmatprep.subr.bf16.mxu0 0
  %1443 = vmatpush1.bf16.msra.mxu0 %v1421
  %1444 = vmatprep.subr.bf16.mxu0 0
  %1445 = vmatpush1.bf16.msra.mxu0 %v1422
  %1446 = vmatprep.subr.bf16.mxu0 0
  %1447 = vmatpush1.bf16.msra.mxu0 %v1423
  %1448 = vmatprep.subr.bf16.mxu0 0
  %1449 = vmatpush1.bf16.msra.mxu0 0
  %1450 = vmatprep.subr.bf16.mxu0 0
  %1451 = vmatpush1.bf16.msra.mxu0 0
  %1452 = vmatprep.subr.bf16.mxu0 0
  %1453 = vmatpush1.bf16.msra.mxu0 0
  %1454 = vmatprep.subr.bf16.mxu0 0
  %1455 = vmatpush1.bf16.msra.mxu0 0
  %1456 = vmatprep.subr.bf16.mxu0 0
  %1457 = vmatpush1.bf16.msra.mxu0 0
  %1458 = vmatprep.subr.bf16.mxu0 0
  %1459 = vmatpush1.bf16.msra.mxu0 0
  %1460 = vmatprep.subr.bf16.mxu0 0
  %1461 = vmatpush1.bf16.msra.mxu0 0
  %1462 = vmatprep.subr.bf16.mxu0 0
  %1463 = vmatpush1.bf16.msra.mxu0 0
  %1464 = vmatprep.mubr.bf16.mxu0 0
  %1465 = vmatmul.mubr.bf16.gmra.mrb[0].mxu0 %v1360
  %v1466 = vpop.f32.mrb[0].mxu0
  %v1467 = vadd.f32 %v1382, %v1466
  %v1468 = vpop.f32.mrb[0].mxu0
  %v1469 = vpop.f32.mrb[0].mxu0
  %v1470 = vpop.f32.mrb[0].mxu0
  %1471 = vdwg.mxu0
  %v1472 = vmax.f32 %v1467, 0.0
  %v1473 = vpack.c.bf16 %v1472, %v1472
  %v1474 = vld [vmem:[%s9] sm:$0xf]
  %v1475 = vld [vmem:[%s9 + $0x4] sm:$0xf]
  %v1476 = vld [vmem:[%s9 + $0x8] sm:$0xf]
  %v1477 = vld [vmem:[%s9 + $0xc] sm:$0xf]
  %v1478 = vld [vmem:[%s9 + $0x10] sm:$0xf]
  %v1479 = vld [vmem:[%s9 + $0x14] sm:$0xf]
  %v1480 = vld [vmem:[%s9 + $0x18] sm:$0xf]
  %v1481 = vld [vmem:[%s9 + $0x1c] sm:$0xf]
  %v1482 = vld [vmem:[%s9 + $0x20] sm:$0xf]
  %v1483 = vld [vmem:[%s9 + $0x24] sm:$0xf]
  %v1484 = vld [vmem:[%s9 + $0x28] sm:$0xf]
  %v1485 = vld [vmem:[%s9 + $0x2c] sm:$0xf]
  %v1486 = vld [vmem:[%s9 + $0x30] sm:$0xf]
  %v1487 = vld [vmem:[%s9 + $0x34] sm:$0xf]
  %v1488 = vld [vmem:[%s9 + $0x38] sm:$0xf]
  %v1489 = vld [vmem:[%s9 + $0x3c] sm:$0xf]
  %v1490 = vld [vmem:[%s10] sm:$0x1]
  %v1492 = vlaneseq
  %v1493 = vshrl.u32 %v1492, 7
  %v1494 = vsub.s32 0, %v1493
  %v1495 = vrot.slane %v1490, %v1494
  %v1513 = vunpack.c.l.b16 %v1474
  %v1514 = vunpack.c.l.b16 %v1475
  %v1515 = vunpack.c.l.b16 %v1476
  %v1516 = vunpack.c.l.b16 %v1477
  %v1517 = vunpack.c.l.b16 %v1478
  %v1518 = vunpack.c.l.b16 %v1479
  %v1519 = vunpack.c.l.b16 %v1480
  %v1520 = vunpack.c.l.b16 %v1481
  %v1521 = vunpack.c.l.b16 %v1482
  %v1522 = vunpack.c.l.b16 %v1483
  %v1523 = vunpack.c.l.b16 %v1484
  %v1524 = vunpack.c.l.b16 %v1485
  %v1525 = vunpack.c.l.b16 %v1486
  %v1526 = vunpack.c.l.b16 %v1487
  %v1527 = vunpack.c.l.b16 %v1488
  %v1528 = vunpack.c.l.b16 %v1489
  %v1529 = vpack.c.b16 %v1514, %v1513
  %v1530 = vpack.c.b16 %v1516, %v1515
  %v1531 = vpack.c.b16 %v1518, %v1517
  %v1532 = vpack.c.b16 %v1520, %v1519
  %v1533 = vpack.c.b16 %v1522, %v1521
  %v1534 = vpack.c.b16 %v1524, %v1523
  %v1535 = vpack.c.b16 %v1526, %v1525
  %v1536 = vpack.c.b16 %v1528, %v1527
  %1545 = vmatprep.subr.bf16.mxu0 0
  %1546 = vmatpush1.bf16.msra.mxu0 %v1529
  %1547 = vmatprep.subr.bf16.mxu0 0
  %1548 = vmatpush1.bf16.msra.mxu0 %v1530
  %1549 = vmatprep.subr.bf16.mxu0 0
  %1550 = vmatpush1.bf16.msra.mxu0 %v1531
  %1551 = vmatprep.subr.bf16.mxu0 0
  %1552 = vmatpush1.bf16.msra.mxu0 %v1532
  %1553 = vmatprep.subr.bf16.mxu0 0
  %1554 = vmatpush1.bf16.msra.mxu0 %v1533
  %1555 = vmatprep.subr.bf16.mxu0 0
  %1556 = vmatpush1.bf16.msra.mxu0 %v1534
  %1557 = vmatprep.subr.bf16.mxu0 0
  %1558 = vmatpush1.bf16.msra.mxu0 %v1535
  %1559 = vmatprep.subr.bf16.mxu0 0
  %1560 = vmatpush1.bf16.msra.mxu0 %v1536
  %1561 = vmatprep.subr.bf16.mxu0 0
  %1562 = vmatpush1.bf16.msra.mxu0 0
  %1563 = vmatprep.subr.bf16.mxu0 0
  %1564 = vmatpush1.bf16.msra.mxu0 0
  %1565 = vmatprep.subr.bf16.mxu0 0
  %1566 = vmatpush1.bf16.msra.mxu0 0
  %1567 = vmatprep.subr.bf16.mxu0 0
  %1568 = vmatpush1.bf16.msra.mxu0 0
  %1569 = vmatprep.subr.bf16.mxu0 0
  %1570 = vmatpush1.bf16.msra.mxu0 0
  %1571 = vmatprep.subr.bf16.mxu0 0
  %1572 = vmatpush1.bf16.msra.mxu0 0
  %1573 = vmatprep.subr.bf16.mxu0 0
  %1574 = vmatpush1.bf16.msra.mxu0 0
  %1575 = vmatprep.subr.bf16.mxu0 0
  %1576 = vmatpush1.bf16.msra.mxu0 0
  %1577 = vmatprep.mubr.bf16.mxu0 0
  %1578 = vmatmul.mubr.bf16.gmra.mrb[0].mxu0 %v1473
  %v1579 = vpop.f32.mrb[0].mxu0
  %v1580 = vadd.f32 %v1495, %v1579
  %v1581 = vpop.f32.mrb[0].mxu0
  %v1582 = vpop.f32.mrb[0].mxu0
  %v1583 = vpop.f32.mrb[0].mxu0
  %1584 = vdwg.mxu0
  %1585 = vst [vmem:[%s11] sm:$0xff] %v1580
  // Predicated region
  $region46: #{compnet4_forward.1} parent=0 // pred_check
    _
  $region47: #{compnet4_forward.1} parent=0 // pred_check_branch
    %1587 = sbr.rel (0) target = $region49
  $region48: #{compnet4_forward.1} parent=0 // pred_region
    _
  $region49: #{compnet4_forward.1} parent=0 // pred_fallthru
    _
  // Predicated region
  $region50: #{compnet4_forward.1} parent=0 // pred_check
    _
  $region51: #{compnet4_forward.1} parent=0 // pred_check_branch
    %1589 = sbr.rel (0) target = $region53
  $region52: #{compnet4_forward.1} parent=0 // pred_region
    _
  $region53: #{compnet4_forward.1} parent=0 // pred_fallthru
    _

</llo_original>
